<compile_context>
chip_gen: v5e
topology: v5e:2x2
jax: 0.10.0
libtpu: 0.0.40
codegen_flags: <defaults>
</compile_context>

<pallas_src>
import functools

import numpy as np
import jax
import jax.numpy as jnp
from jax.experimental import pallas as pl
from jax.experimental.pallas import tpu as pltpu


def _round_up(x, m):
    return (x + m - 1) // m * m


# --------------------------------------------------------------------------- #
# Pallas kernel: one batch tile (Bt rows) per grid step, everything fused.
# --------------------------------------------------------------------------- #
def _istft_head_kernel(x_ref, w_ref, b_ref, cd_ref, envinv_ref, out_ref, acc_ref,
                       *, n_frames, bt, hop, n_fft, f_pad):
    # x_ref: (n_frames * bt, H) -- frame-major rows (row f*bt + b == frame f, batch b)
    x = x_ref[...]

    # 1) Linear projection.  W is laid out [mag | phase], each half zero-padded to
    #    f_pad (multiple of 128) lanes -> the split below is a free, aligned slice.
    h = jnp.dot(x, w_ref[...], preferred_element_type=jnp.float32) + b_ref[...]

    mag = jnp.minimum(jnp.exp(h[:, :f_pad]), 100.0)          # exp + clip(max=100)
    p = h[:, f_pad:]
    re = mag * jnp.cos(p)                                    # Re(S)
    im = mag * jnp.sin(p)                                    # Im(S)

    # 2) Windowed irfft (norm="backward") as a single fused matmul:
    #    [re | im] @ [Cw; Dw], bf16 inputs, f32 accumulation.  Padded rows of the
    #    stacked DFT matrix are zero, so padded mag/phase lanes contribute nothing
    #    (padded lanes hold re=1, im=0, multiplied by zero rows).
    ri = jnp.concatenate([re, im], axis=-1).astype(jnp.bfloat16)   # (M, 2*f_pad)
    frames = jnp.dot(ri, cd_ref[...],
                     preferred_element_type=jnp.float32)           # (M, n_fft)

    # 3) Overlap-add into the VMEM accumulator (contiguous bt-row blocks per frame),
    #    then one multiply by 1/window_envelope (normalisation + pad-trim baked in;
    #    the actual trim slice happens in the wrapper).
    acc_ref[...] = jnp.zeros_like(acc_ref)
    for f in range(n_frames):                                # small static L here
        acc_ref[:, pl.ds(f * hop, n_fft)] += frames[f * bt:(f + 1) * bt, :]
    out_ref[...] = acc_ref[...] * envinv_ref[...]


def istft_head_forward(x, w_proj, b_proj, cd, env_inv, *, n_fft, hop, pad,
                       t_audio, bt=8):
    B, L, H = x.shape
    f_pad = w_proj.shape[1] // 2
    t_acc = env_inv.shape[-1]

    # Pad batch to a multiple of the batch tile and permute to frame-major rows so
    # the kernel sees a plain 2-D (L*bt, H) block per grid step.
    b_pad = _round_up(B, bt)
    x_p = jnp.pad(x, ((0, b_pad - B), (0, 0), (0, 0))) if b_pad != B else x
    n_blocks = b_pad // bt
    x_rows = (x_p.reshape(n_blocks, bt, L, H)
                 .transpose((0, 2, 1, 3))                    # (blocks, L, bt, H)
                 .reshape(n_blocks * L * bt, H))

    kernel = functools.partial(_istft_head_kernel, n_frames=L, bt=bt,
                               hop=hop, n_fft=n_fft, f_pad=f_pad)

    out = pl.pallas_call(
        kernel,
        out_shape=jax.ShapeDtypeStruct((b_pad, t_acc), jnp.float32),
        grid=(n_blocks,),
        in_specs=[
            pl.BlockSpec((L * bt, H), lambda bi: (bi, 0)),          # x rows (frame-major)
            pl.BlockSpec((H, 2 * f_pad), lambda bi: (0, 0)),        # W  [mag | phase]
            pl.BlockSpec((1, 2 * f_pad), lambda bi: (0, 0)),        # bias
            pl.BlockSpec((2 * f_pad, n_fft), lambda bi: (0, 0)),    # [Cw; Dw] (bf16)
            pl.BlockSpec((1, t_acc), lambda bi: (0, 0)),            # 1 / window_envelope
        ],
        out_specs=pl.BlockSpec((bt, t_acc), lambda bi: (bi, 0)),
        scratch_shapes=[pltpu.VMEM((bt, t_acc), jnp.float32)],      # OLA accumulator
        compiler_params=pltpu.CompilerParams(
            dimension_semantics=("parallel",),
            vmem_limit_bytes=32 * 1024 * 1024,
        ),
    )(x_rows, w_proj, b_proj, cd, env_inv)

    # Trim batch padding and the "same"-padding head/tail.
    return out[:B, pad:pad + t_audio]


# --------------------------------------------------------------------------- #
# Parameter / constant construction (glue, plain numpy/JAX).
# --------------------------------------------------------------------------- #
def make_istft_head_params(dim, n_fft, hop_length, L, key, win_length=None,
                           padding="same"):
    assert padding == "same"
    if win_length is None or win_length <= 0:
        win_length = n_fft
    assert win_length == n_fft, "reference ISTFT requires win_length == n_fft"
    F = n_fft // 2 + 1
    f_pad = _round_up(F, 128)

    kw, kb = jax.random.split(key)
    W = jax.random.normal(kw, (dim, 2 * F), jnp.float32) / np.sqrt(dim)
    b = jax.random.normal(kb, (2 * F,), jnp.float32) * 0.01

    # Lane-aligned [mag | phase] layout, each half padded to f_pad lanes.
    W_np, b_np = np.asarray(W), np.asarray(b)
    w_proj = np.zeros((dim, 2 * f_pad), np.float32)
    w_proj[:, :F] = W_np[:, :F]
    w_proj[:, f_pad:f_pad + F] = W_np[:, F:]
    b_proj = np.zeros((1, 2 * f_pad), np.float32)
    b_proj[0, :F] = b_np[:F]
    b_proj[0, f_pad:f_pad + F] = b_np[F:]

    # torch.hann_window(win_length) (periodic).
    n = np.arange(win_length)
    window = 0.5 - 0.5 * np.cos(2.0 * np.pi * n / win_length)

    # irfft(norm="backward") as a real matmul; window folded in.  Stacked [Cw; Dw]
    # with zero rows in the lane-padding region (so padded lanes contribute nothing).
    # sin(theta) is identically zero at DC / Nyquist, matching torch.fft.irfft
    # discarding the imaginary parts of those bins.
    k = np.arange(F)[:, None].astype(np.float64)
    t = np.arange(n_fft)[None, :].astype(np.float64)
    theta = 2.0 * np.pi * k * t / n_fft
    coef = np.full((F, 1), 2.0 / n_fft)
    coef[0, 0] = 1.0 / n_fft
    coef[-1, 0] = 1.0 / n_fft
    Cw = coef * np.cos(theta) * window[None, :]
    Dw = -coef * np.sin(theta) * window[None, :]
    cd = np.zeros((2 * f_pad, n_fft), np.float32)
    cd[:F] = Cw
    cd[f_pad:f_pad + F] = Dw

    # 1 / window_envelope with the "same"-padding trim baked in; lane-padded length.
    hop = hop_length
    pad = (win_length - hop) // 2
    t_out = (L - 1) * hop + win_length
    t_audio = t_out - 2 * pad
    t_acc = _round_up(t_out, 128)
    env = np.zeros(t_out)
    for f in range(L):
        env[f * hop: f * hop + win_length] += window ** 2
    assert (env[pad:t_out - pad] > 1e-11).all()
    env_inv = np.zeros((1, t_acc), np.float32)
    env_inv[0, pad:t_out - pad] = 1.0 / env[pad:t_out - pad]

    return dict(
        W=W, b=b,
        w_proj=jnp.asarray(w_proj), b_proj=jnp.asarray(b_proj),
        cd=jnp.asarray(cd, dtype=jnp.bfloat16),
        env_inv=jnp.asarray(env_inv),
        window=jnp.asarray(window.astype(np.float32)),
        n_fft=n_fft, hop=hop, pad=pad, t_audio=t_audio,
    )


# --------------------------------------------------------------------------- #
# Pure-JAX reference (mirrors the PyTorch forward) for a correctness check.
# --------------------------------------------------------------------------- #
def reference_forward(x, W, b, window, n_fft, hop, pad):
    h = x @ W + b                                      # (B, L, n_fft+2)
    F = n_fft // 2 + 1
    mag = jnp.minimum(jnp.exp(h[..., :F]), 100.0)
    p = h[..., F:]
    re = mag * jnp.cos(p)
    im = mag * jnp.sin(p)
    # torch.fft.irfft ignores imag at DC / Nyquist; make that explicit.
    im = im.at[..., 0].set(0.0).at[..., -1].set(0.0)
    S = re + 1j * im
    frames = jnp.fft.irfft(S, n=n_fft, axis=-1) * window[None, None, :]
    B, L, _ = frames.shape
    Tout = (L - 1) * hop + n_fft
    y = jnp.zeros((B, Tout), jnp.float32)
    env = jnp.zeros((Tout,), jnp.float32)
    for f in range(L):
        y = y.at[:, f * hop: f * hop + n_fft].add(frames[:, f, :])
        env = env.at[f * hop: f * hop + n_fft].add(window ** 2)
    return y[:, pad: Tout - pad] / env[pad: Tout - pad]


if __name__ == "__main__":
    B, L, H = 2, 8, 32          # batch, frames, hidden dim
    n_fft, hop = 16, 4          # out_dim = n_fft + 2 = 18, F = 9

    key = jax.random.PRNGKey(0)
    kx, kp = jax.random.split(key)
    x = jax.random.normal(kx, (B, L, H), jnp.float32)

    prm = make_istft_head_params(H, n_fft, hop, L, kp)

    audio = istft_head_forward(
        x, prm["w_proj"], prm["b_proj"], prm["cd"], prm["env_inv"],
        n_fft=n_fft, hop=hop, pad=prm["pad"], t_audio=prm["t_audio"])
    audio = jax.block_until_ready(audio)

    ref = reference_forward(x, prm["W"], prm["b"], prm["window"], n_fft, hop,
                            prm["pad"])
    assert audio.shape == ref.shape, (audio.shape, ref.shape)
    # Tolerance reflects the bf16-input (f32-accumulate) iRFFT matmul in the kernel.
    np.testing.assert_allclose(np.asarray(audio), np.asarray(ref),
                               rtol=2e-2, atol=2e-2)
    print("KERNEL_OK")
</pallas_src>

<mosaic_0001>
module attributes {stable_mosaic.version = 11 : i64} {
  func.func @_istft_head_kernel(%arg0: i32, %arg1: memref<64x32xf32, #tpu.memory_space<vmem>>, %arg2: memref<32x256xf32, #tpu.memory_space<vmem>>, %arg3: memref<1x256xf32, #tpu.memory_space<vmem>>, %arg4: memref<256x16xbf16, #tpu.memory_space<vmem>>, %arg5: memref<1x128xf32, #tpu.memory_space<vmem>>, %arg6: memref<8x128xf32, #tpu.memory_space<vmem>>, %arg7: memref<8x128xf32, #tpu.memory_space<vmem>>) attributes {dimension_semantics = [#tpu.dimension_semantics<parallel>], iteration_bounds = array<i64: 1>, scalar_prefetch = 0 : i64, scratch_operands = 1 : i64, tpu.core_type = #tpu.core_type<tc>, window_params = [{transform_indices = @transform_0, window_bounds = array<i64: 64, 32>}, {pipeline_mode = #tpu.pipeline_mode<synchronous>, transform_indices = @transform_1, window_bounds = array<i64: 32, 256>}, {pipeline_mode = #tpu.pipeline_mode<synchronous>, transform_indices = @transform_2, window_bounds = array<i64: 1, 256>}, {pipeline_mode = #tpu.pipeline_mode<synchronous>, transform_indices = @transform_3, window_bounds = array<i64: 256, 16>}, {pipeline_mode = #tpu.pipeline_mode<synchronous>, transform_indices = @transform_4, window_bounds = array<i64: 1, 128>}, {transform_indices = @transform_5, window_bounds = array<i64: 8, 128>}]} {
    %c0 = arith.constant 0 : index
    %c0_0 = arith.constant 0 : index
    %0 = vector.load %arg1[%c0, %c0_0] : memref<64x32xf32, #tpu.memory_space<vmem>>, vector<64x32xf32>
    %c0_1 = arith.constant 0 : index
    %c0_2 = arith.constant 0 : index
    %1 = vector.load %arg2[%c0_1, %c0_2] : memref<32x256xf32, #tpu.memory_space<vmem>>, vector<32x256xf32>
    %cst = arith.constant dense<0.000000e+00> : vector<64x256xf32>
    %2 = tpu.matmul %0, %1, %cst {dimension_numbers = #tpu.dot_dimension_numbers<[1], [0], [0], [1], [0, 0, 1, 1], [], []>} : vector<64x32xf32>, vector<32x256xf32>, vector<64x256xf32> -> vector<64x256xf32>
    %c0_3 = arith.constant 0 : index
    %c0_4 = arith.constant 0 : index
    %3 = vector.load %arg3[%c0_3, %c0_4] : memref<1x256xf32, #tpu.memory_space<vmem>>, vector<1x256xf32>
    %4 = vector.broadcast %3 : vector<1x256xf32> to vector<64x256xf32>
    %5 = arith.addf %2, %4 : vector<64x256xf32>
    %6 = vector.extract_strided_slice %5 {offsets = [0, 0], sizes = [64, 128], strides = [1, 1]} : vector<64x256xf32> to vector<64x128xf32>
    %7 = math.exp %6 : vector<64x128xf32>
    %cst_5 = arith.constant 1.000000e+02 : f32
    %8 = vector.broadcast %cst_5 : f32 to vector<64x128xf32>
    %9 = arith.minimumf %7, %8 : vector<64x128xf32>
    %10 = vector.extract_strided_slice %5 {offsets = [0, 128], sizes = [64, 128], strides = [1, 1]} : vector<64x256xf32> to vector<64x128xf32>
    %11 = math.cos %10 : vector<64x128xf32>
    %12 = arith.mulf %9, %11 : vector<64x128xf32>
    %13 = math.sin %10 : vector<64x128xf32>
    %14 = arith.mulf %9, %13 : vector<64x128xf32>
    %15 = tpu.concatenate %12, %14 in 1 : vector<64x128xf32>, vector<64x128xf32> -> vector<64x256xf32>
    %16 = arith.truncf %15 : vector<64x256xf32> to vector<64x256xbf16>
    %c0_6 = arith.constant 0 : index
    %c0_7 = arith.constant 0 : index
    %17 = vector.load %arg4[%c0_6, %c0_7] : memref<256x16xbf16, #tpu.memory_space<vmem>>, vector<256x16xbf16>
    %cst_8 = arith.constant dense<0.000000e+00> : vector<64x16xf32>
    %18 = tpu.matmul %16, %17, %cst_8 {dimension_numbers = #tpu.dot_dimension_numbers<[1], [0], [0], [1], [0, 0, 1, 1], [], []>} : vector<64x256xbf16>, vector<256x16xbf16>, vector<64x16xf32> -> vector<64x16xf32>
    %cst_9 = arith.constant 0.000000e+00 : f32
    %19 = vector.broadcast %cst_9 : f32 to vector<8x128xf32>
    %c0_10 = arith.constant 0 : index
    %c0_11 = arith.constant 0 : index
    %20 = vector.load %arg7[%c0_10, %c0_11] : memref<8x128xf32, #tpu.memory_space<vmem>>, vector<8x128xf32>
    tpu.vector_store %arg7[%c0_10, %c0_11], %19 {strides = array<i32>} : memref<8x128xf32, #tpu.memory_space<vmem>>, vector<8x128xf32>,
    %c0_12 = arith.constant 0 : index
    %c0_13 = arith.constant 0 : index
    %21 = vector.load %arg7[%c0_12, %c0_13] : memref<8x128xf32, #tpu.memory_space<vmem>>, vector<8x16xf32>
    %22 = vector.extract_strided_slice %18 {offsets = [0, 0], sizes = [8, 16], strides = [1, 1]} : vector<64x16xf32> to vector<8x16xf32>
    %23 = arith.addf %21, %22 : vector<8x16xf32>
    %c0_14 = arith.constant 0 : index
    %c0_15 = arith.constant 0 : index
    %24 = vector.load %arg7[%c0_14, %c0_15] : memref<8x128xf32, #tpu.memory_space<vmem>>, vector<8x16xf32>
    tpu.vector_store %arg7[%c0_14, %c0_15], %23 {strides = array<i32>} : memref<8x128xf32, #tpu.memory_space<vmem>>, vector<8x16xf32>,
    %c0_16 = arith.constant 0 : index
    %c4 = arith.constant 4 : index
    %25 = vector.load %arg7[%c0_16, %c4] : memref<8x128xf32, #tpu.memory_space<vmem>>, vector<8x16xf32>
    %26 = vector.extract_strided_slice %18 {offsets = [8, 0], sizes = [8, 16], strides = [1, 1]} : vector<64x16xf32> to vector<8x16xf32>
    %27 = arith.addf %25, %26 : vector<8x16xf32>
    %c0_17 = arith.constant 0 : index
    %c4_18 = arith.constant 4 : index
    %28 = vector.load %arg7[%c0_17, %c4_18] : memref<8x128xf32, #tpu.memory_space<vmem>>, vector<8x16xf32>
    tpu.vector_store %arg7[%c0_17, %c4_18], %27 {strides = array<i32>} : memref<8x128xf32, #tpu.memory_space<vmem>>, vector<8x16xf32>,
    %c0_19 = arith.constant 0 : index
    %c8 = arith.constant 8 : index
    %29 = vector.load %arg7[%c0_19, %c8] : memref<8x128xf32, #tpu.memory_space<vmem>>, vector<8x16xf32>
    %30 = vector.extract_strided_slice %18 {offsets = [16, 0], sizes = [8, 16], strides = [1, 1]} : vector<64x16xf32> to vector<8x16xf32>
    %31 = arith.addf %29, %30 : vector<8x16xf32>
    %c0_20 = arith.constant 0 : index
    %c8_21 = arith.constant 8 : index
    %32 = vector.load %arg7[%c0_20, %c8_21] : memref<8x128xf32, #tpu.memory_space<vmem>>, vector<8x16xf32>
    tpu.vector_store %arg7[%c0_20, %c8_21], %31 {strides = array<i32>} : memref<8x128xf32, #tpu.memory_space<vmem>>, vector<8x16xf32>,
    %c0_22 = arith.constant 0 : index
    %c12 = arith.constant 12 : index
    %33 = vector.load %arg7[%c0_22, %c12] : memref<8x128xf32, #tpu.memory_space<vmem>>, vector<8x16xf32>
    %34 = vector.extract_strided_slice %18 {offsets = [24, 0], sizes = [8, 16], strides = [1, 1]} : vector<64x16xf32> to vector<8x16xf32>
    %35 = arith.addf %33, %34 : vector<8x16xf32>
    %c0_23 = arith.constant 0 : index
    %c12_24 = arith.constant 12 : index
    %36 = vector.load %arg7[%c0_23, %c12_24] : memref<8x128xf32, #tpu.memory_space<vmem>>, vector<8x16xf32>
    tpu.vector_store %arg7[%c0_23, %c12_24], %35 {strides = array<i32>} : memref<8x128xf32, #tpu.memory_space<vmem>>, vector<8x16xf32>,
    %c0_25 = arith.constant 0 : index
    %c16 = arith.constant 16 : index
    %37 = vector.load %arg7[%c0_25, %c16] : memref<8x128xf32, #tpu.memory_space<vmem>>, vector<8x16xf32>
    %38 = vector.extract_strided_slice %18 {offsets = [32, 0], sizes = [8, 16], strides = [1, 1]} : vector<64x16xf32> to vector<8x16xf32>
    %39 = arith.addf %37, %38 : vector<8x16xf32>
    %c0_26 = arith.constant 0 : index
    %c16_27 = arith.constant 16 : index
    %40 = vector.load %arg7[%c0_26, %c16_27] : memref<8x128xf32, #tpu.memory_space<vmem>>, vector<8x16xf32>
    tpu.vector_store %arg7[%c0_26, %c16_27], %39 {strides = array<i32>} : memref<8x128xf32, #tpu.memory_space<vmem>>, vector<8x16xf32>,
    %c0_28 = arith.constant 0 : index
    %c20 = arith.constant 20 : index
    %41 = vector.load %arg7[%c0_28, %c20] : memref<8x128xf32, #tpu.memory_space<vmem>>, vector<8x16xf32>
    %42 = vector.extract_strided_slice %18 {offsets = [40, 0], sizes = [8, 16], strides = [1, 1]} : vector<64x16xf32> to vector<8x16xf32>
    %43 = arith.addf %41, %42 : vector<8x16xf32>
    %c0_29 = arith.constant 0 : index
    %c20_30 = arith.constant 20 : index
    %44 = vector.load %arg7[%c0_29, %c20_30] : memref<8x128xf32, #tpu.memory_space<vmem>>, vector<8x16xf32>
    tpu.vector_store %arg7[%c0_29, %c20_30], %43 {strides = array<i32>} : memref<8x128xf32, #tpu.memory_space<vmem>>, vector<8x16xf32>,
    %c0_31 = arith.constant 0 : index
    %c24 = arith.constant 24 : index
    %45 = vector.load %arg7[%c0_31, %c24] : memref<8x128xf32, #tpu.memory_space<vmem>>, vector<8x16xf32>
    %46 = vector.extract_strided_slice %18 {offsets = [48, 0], sizes = [8, 16], strides = [1, 1]} : vector<64x16xf32> to vector<8x16xf32>
    %47 = arith.addf %45, %46 : vector<8x16xf32>
    %c0_32 = arith.constant 0 : index
    %c24_33 = arith.constant 24 : index
    %48 = vector.load %arg7[%c0_32, %c24_33] : memref<8x128xf32, #tpu.memory_space<vmem>>, vector<8x16xf32>
    tpu.vector_store %arg7[%c0_32, %c24_33], %47 {strides = array<i32>} : memref<8x128xf32, #tpu.memory_space<vmem>>, vector<8x16xf32>,
    %c0_34 = arith.constant 0 : index
    %c28 = arith.constant 28 : index
    %49 = vector.load %arg7[%c0_34, %c28] : memref<8x128xf32, #tpu.memory_space<vmem>>, vector<8x16xf32>
    %50 = vector.extract_strided_slice %18 {offsets = [56, 0], sizes = [8, 16], strides = [1, 1]} : vector<64x16xf32> to vector<8x16xf32>
    %51 = arith.addf %49, %50 : vector<8x16xf32>
    %c0_35 = arith.constant 0 : index
    %c28_36 = arith.constant 28 : index
    %52 = vector.load %arg7[%c0_35, %c28_36] : memref<8x128xf32, #tpu.memory_space<vmem>>, vector<8x16xf32>
    tpu.vector_store %arg7[%c0_35, %c28_36], %51 {strides = array<i32>} : memref<8x128xf32, #tpu.memory_space<vmem>>, vector<8x16xf32>,
    %c0_37 = arith.constant 0 : index
    %c0_38 = arith.constant 0 : index
    %53 = vector.load %arg7[%c0_37, %c0_38] : memref<8x128xf32, #tpu.memory_space<vmem>>, vector<8x128xf32>
    %c0_39 = arith.constant 0 : index
    %c0_40 = arith.constant 0 : index
    %54 = vector.load %arg5[%c0_39, %c0_40] : memref<1x128xf32, #tpu.memory_space<vmem>>, vector<1x128xf32>
    %55 = vector.broadcast %54 : vector<1x128xf32> to vector<8x128xf32>
    %56 = arith.mulf %53, %55 : vector<8x128xf32>
    %c0_41 = arith.constant 0 : index
    %c0_42 = arith.constant 0 : index
    %57 = vector.load %arg6[%c0_41, %c0_42] : memref<8x128xf32, #tpu.memory_space<vmem>>, vector<8x128xf32>
    tpu.vector_store %arg6[%c0_41, %c0_42], %56 {strides = array<i32>} : memref<8x128xf32, #tpu.memory_space<vmem>>, vector<8x128xf32>,
    return
  }
  func.func @transform_0(%arg0: i32) -> (i32, i32) {
    %c0_i32 = arith.constant 0 : i32
    %c0_i32_0 = arith.constant 0 : i32
    return %arg0, %c0_i32 : i32, i32
  }
  func.func @transform_1(%arg0: i32) -> (i32, i32) {
    %c0_i32 = arith.constant 0 : i32
    %c0_i32_0 = arith.constant 0 : i32
    %c0_i32_1 = arith.constant 0 : i32
    return %c0_i32, %c0_i32_0 : i32, i32
  }
  func.func @transform_2(%arg0: i32) -> (i32, i32) {
    %c0_i32 = arith.constant 0 : i32
    %c0_i32_0 = arith.constant 0 : i32
    %c0_i32_1 = arith.constant 0 : i32
    return %c0_i32, %c0_i32_0 : i32, i32
  }
  func.func @transform_3(%arg0: i32) -> (i32, i32) {
    %c0_i32 = arith.constant 0 : i32
    %c0_i32_0 = arith.constant 0 : i32
    %c0_i32_1 = arith.constant 0 : i32
    return %c0_i32, %c0_i32_0 : i32, i32
  }
  func.func @transform_4(%arg0: i32) -> (i32, i32) {
    %c0_i32 = arith.constant 0 : i32
    %c0_i32_0 = arith.constant 0 : i32
    %c0_i32_1 = arith.constant 0 : i32
    return %c0_i32, %c0_i32_0 : i32, i32
  }
  func.func @transform_5(%arg0: i32) -> (i32, i32) {
    %c0_i32 = arith.constant 0 : i32
    %c0_i32_0 = arith.constant 0 : i32
    return %arg0, %c0_i32 : i32, i32
  }
}

</mosaic_0001>

<llo_original>
// kernel: tpu_custom_call.1
$region0: #{tpu_custom_call.1}
  #allocation0 [shape = 'u32[]', space=smem, size = 0x4, offset = 0x4, fixed_abs, tag = 'smem constant byte address 0x4 - core index']
  #allocation1 [shape = 'u32[72,128]{1,0:T(1,128)}', space=vmem, size = 0x9000, scoped, tag = 'internal scratch']
  #allocation2 [shape = 'f32[8,128]{1,0:T(8,128)}', space=vmem, size = 0x1000, scoped, tag = 'scratch operand']
  %s0 = inlined_call_operand.vmem [shape: f32[64,32], index: 0, kind: input, shape index: {}]
  %s1 = inlined_call_operand.vmem [shape: f32[32,256], index: 1, kind: input, shape index: {}]
  %s2 = inlined_call_operand.vmem [shape: f32[1,256], index: 2, kind: input, shape index: {}]
  %s3 = inlined_call_operand.vmem [shape: bf16[256,16], index: 3, kind: input, shape index: {}]
  %s4 = inlined_call_operand.vmem [shape: f32[1,128], index: 4, kind: input, shape index: {}]
  %s5 = inlined_call_operand.hbm [shape: f32[8,128], index: 5, kind: output, shape index: {}]
  %s6 = sld [smem:[#allocation0]]
  $region30: #{tpu_custom_call.1} parent=0
    _
  %s8 = ssub.s32 1, %s6
  %s9 = scalar_select 0, %s8, %s6
  $region1: #{tpu_custom_call.1} parent=0
    #allocation3 [shape = 'u8[4096]{0}', space=vmem, size = 0x1000, scoped, tag = 'output window, operand 0, single buffered']
    #allocation4 [shape = 's32[1]{0}', space=sflag, size = 0x4, scoped, tag = 'scoped memory for tpu_custom_call.1']
    %10 = vsyncpa [#allocation4], 0
    // Predicated region
    $region2: #{tpu_custom_call.1} parent=1 // pred_check
      _
    $region3: #{tpu_custom_call.1} parent=1 // pred_check_branch
      %12 = sbr.rel (0) target = $region5
    $region4: #{tpu_custom_call.1} parent=1 // pred_region
      _
    $region5: #{tpu_custom_call.1} parent=1 // pred_fallthru
      _
    // Predicated region
    $region6: #{tpu_custom_call.1} parent=1 // pred_check
      _
    $region7: #{tpu_custom_call.1} parent=1 // pred_check_branch
      %14 = sbr.rel (0) target = $region9
    $region8: #{tpu_custom_call.1} parent=1 // pred_region
      _
    $region9: #{tpu_custom_call.1} parent=1 // pred_fallthru
      _
    // Predicated region
    $region10: #{tpu_custom_call.1} parent=1 // pred_check
      _
    $region11: #{tpu_custom_call.1} parent=1 // pred_check_branch
      %16 = sbr.rel (0) target = $region13
    $region12: #{tpu_custom_call.1} parent=1 // pred_region
      _
    $region13: #{tpu_custom_call.1} parent=1 // pred_fallthru
      _
    // Predicated region
    $region14: #{tpu_custom_call.1} parent=1 // pred_check
      _
    $region15: #{tpu_custom_call.1} parent=1 // pred_check_branch
      %18 = sbr.rel (0) target = $region17
    $region16: #{tpu_custom_call.1} parent=1 // pred_region
      _
    $region17: #{tpu_custom_call.1} parent=1 // pred_fallthru
      _
    // Predicated region
    $region18: #{tpu_custom_call.1} parent=1 // pred_check
      _
    $region19: #{tpu_custom_call.1} parent=1 // pred_check_branch
      %20 = sbr.rel (0) target = $region21
    $region20: #{tpu_custom_call.1} parent=1 // pred_region
      _
    $region21: #{tpu_custom_call.1} parent=1 // pred_fallthru
      _
    %v21 = vld [vmem:[%s0] sm:$0xff]
    %v22 = vld [vmem:[%s0 + $0x8] sm:$0xff]
    %v23 = vld [vmem:[%s0 + $0x10] sm:$0xff]
    %v24 = vld [vmem:[%s0 + $0x18] sm:$0xff]
    %v25 = vld [vmem:[%s0 + $0x20] sm:$0xff]
    %v26 = vld [vmem:[%s0 + $0x28] sm:$0xff]
    %v27 = vld [vmem:[%s0 + $0x30] sm:$0xff]
    %v28 = vld [vmem:[%s0 + $0x38] sm:$0xff]
    %v29 = vld [vmem:[%s1] sm:$0xff]
    %v30 = vld [vmem:[%s1 + $0x8] sm:$0xff]
    %v31 = vld [vmem:[%s1 + $0x10] sm:$0xff]
    %v32 = vld [vmem:[%s1 + $0x18] sm:$0xff]
    %v33 = vld [vmem:[%s1 + $0x20] sm:$0xff]
    %v34 = vld [vmem:[%s1 + $0x28] sm:$0xff]
    %v35 = vld [vmem:[%s1 + $0x30] sm:$0xff]
    %v36 = vld [vmem:[%s1 + $0x38] sm:$0xff]
    %v37 = vld [vmem:[%s2] sm:$0x3]
    %v39 = vperm.slane %v37, 0
    %v40 = vperm.slane %v37, 1
    %vm43 = vcmask 261120
    %v45 = vsel %vm43, %v21, 0
    %v48 = vsel %vm43, %v22, 0
    %v51 = vsel %vm43, %v23, 0
    %v54 = vsel %vm43, %v24, 0
    %v57 = vsel %vm43, %v25, 0
    %v60 = vsel %vm43, %v26, 0
    %v63 = vsel %vm43, %v27, 0
    %v66 = vsel %vm43, %v28, 0
    %68 = vmatpush.msra.mxu0 0.0
    %69 = vmatpush.msra.mxu0 0.0
    %70 = vmatpush.msra.mxu0 0.0
    %71 = vmatpush.msra.mxu0 0.0
    %72 = vmatpush.msra.mxu0 0.0
    %73 = vmatpush.msra.mxu0 0.0
    %74 = vmatpush.msra.mxu0 0.0
    %75 = vmatpush.msra.mxu0 0.0
    %76 = vmatpush.msra.mxu0 0.0
    %77 = vmatpush.msra.mxu0 0.0
    %78 = vmatpush.msra.mxu0 0.0
    %79 = vmatpush.msra.mxu0 0.0
    %80 = vmatpush.msra.mxu0 %v35
    %81 = vmatpush.msra.mxu0 %v33
    %82 = vmatpush.msra.mxu0 %v31
    %83 = vmatpush.msra.mxu0 %v29
    %84 = vmatmul.f32.gmra.mxu0 %v45
    %v85 = vpop.f32.mrf.mxu0
    %v86 = vadd.f32 %v39, %v85
    %87 = vmatmul.f32.gmra.mxu0 %v48
    %v88 = vpop.f32.mrf.mxu0
    %v89 = vadd.f32 %v39, %v88
    %90 = vmatmul.f32.gmra.mxu0 %v51
    %v91 = vpop.f32.mrf.mxu0
    %v92 = vadd.f32 %v39, %v91
    %93 = vmatmul.f32.gmra.mxu0 %v54
    %v94 = vpop.f32.mrf.mxu0
    %v95 = vadd.f32 %v39, %v94
    %96 = vmatmul.f32.gmra.mxu0 %v57
    %v97 = vpop.f32.mrf.mxu0
    %v98 = vadd.f32 %v39, %v97
    %99 = vmatmul.f32.gmra.mxu0 %v60
    %v100 = vpop.f32.mrf.mxu0
    %v101 = vadd.f32 %v39, %v100
    %102 = vmatmul.f32.gmra.mxu0 %v63
    %v103 = vpop.f32.mrf.mxu0
    %v104 = vadd.f32 %v39, %v103
    %105 = vmatmul.f32.gmra.mxu0 %v66
    %v106 = vpop.f32.mrf.mxu0
    %v107 = vadd.f32 %v39, %v106
    %108 = vdwg.mxu0
    %109 = vmatpush.msra.mxu0 0.0
    %110 = vmatpush.msra.mxu0 0.0
    %111 = vmatpush.msra.mxu0 0.0
    %112 = vmatpush.msra.mxu0 0.0
    %113 = vmatpush.msra.mxu0 0.0
    %114 = vmatpush.msra.mxu0 0.0
    %115 = vmatpush.msra.mxu0 0.0
    %116 = vmatpush.msra.mxu0 0.0
    %117 = vmatpush.msra.mxu0 0.0
    %118 = vmatpush.msra.mxu0 0.0
    %119 = vmatpush.msra.mxu0 0.0
    %120 = vmatpush.msra.mxu0 0.0
    %121 = vmatpush.msra.mxu0 %v36
    %122 = vmatpush.msra.mxu0 %v34
    %123 = vmatpush.msra.mxu0 %v32
    %124 = vmatpush.msra.mxu0 %v30
    %125 = vmatmul.f32.gmra.mxu0 %v45
    %v126 = vpop.f32.mrf.mxu0
    %v127 = vadd.f32 %v40, %v126
    %128 = vmatmul.f32.gmra.mxu0 %v48
    %v129 = vpop.f32.mrf.mxu0
    %v130 = vadd.f32 %v40, %v129
    %131 = vmatmul.f32.gmra.mxu0 %v51
    %v132 = vpop.f32.mrf.mxu0
    %v133 = vadd.f32 %v40, %v132
    %134 = vmatmul.f32.gmra.mxu0 %v54
    %v135 = vpop.f32.mrf.mxu0
    %v136 = vadd.f32 %v40, %v135
    %137 = vmatmul.f32.gmra.mxu0 %v57
    %v138 = vpop.f32.mrf.mxu0
    %v139 = vadd.f32 %v40, %v138
    %140 = vmatmul.f32.gmra.mxu0 %v60
    %v141 = vpop.f32.mrf.mxu0
    %v142 = vadd.f32 %v40, %v141
    %143 = vmatmul.f32.gmra.mxu0 %v63
    %v144 = vpop.f32.mrf.mxu0
    %v145 = vadd.f32 %v40, %v144
    %146 = vmatmul.f32.gmra.mxu0 %v66
    %v147 = vpop.f32.mrf.mxu0
    %v148 = vadd.f32 %v40, %v147
    %149 = vdwg.mxu0
    %v150 = vmul.f32 %v86, 1.442695
    %v151 = vpow.pop %v150
    %v152 = vmul.f32 %v89, 1.442695
    %v153 = vpow.pop %v152
    %v154 = vmul.f32 %v92, 1.442695
    %v155 = vpow.pop %v154
    %v156 = vmul.f32 %v95, 1.442695
    %v157 = vpow.pop %v156
    %v158 = vmul.f32 %v98, 1.442695
    %v159 = vpow.pop %v158
    %v160 = vmul.f32 %v101, 1.442695
    %v161 = vpow.pop %v160
    %v162 = vmul.f32 %v104, 1.442695
    %v163 = vpow.pop %v162
    %v164 = vmul.f32 %v107, 1.442695
    %v165 = vpow.pop %v164
    %v166 = vmin.f32 %v151, 100.0
    %v167 = vmin.f32 %v153, 100.0
    %v168 = vmin.f32 %v155, 100.0
    %v169 = vmin.f32 %v157, 100.0
    %v170 = vmin.f32 %v159, 100.0
    %v171 = vmin.f32 %v161, 100.0
    %v172 = vmin.f32 %v163, 100.0
    %v173 = vmin.f32 %v165, 100.0
    %v174 = vand.u32 2147483647, %v127
    %vm175 = vcmp.le.f32.partialorder %v174, 0.7853982
    %vm176 = vcmp.lt.s32.totalorder %v127, 0
    %v177 = vand.u32 %v127, 2139095040
    %v178 = vshrl.u32 %v177, 23
    %v179 = vsub.s32 %v178, 127
    %v180 = vand.u32 2147483647, %v127
    %v181 = vand.u32 %v180, 8388607
    %v182 = vor.u32 %v181, 8388608
    %v183 = vsub.s32 0, %v182
    %v184 = vadd.s32 %v179, 1
    %vm185 = vcmp.gt.s32.totalorder %v184, 0
    %v186 = vsel %vm185, %v184, 0
    %v187 = vshrl.u32 %v186, 5
    %v188 = vand.u32 %v186, 31
    %v189 = vsub.s32 32, %v188
    %v190 = vshrl.u32 683565275, %v189
    %v191 = vshll.u32 683565275, %v188
    %v192 = vshrl.u32 2475754826, %v189
    %v193 = vor.u32 %v191, %v192
    %v194 = vshll.u32 2475754826, %v188
    %v195 = vshrl.u32 2131351028, %v189
    %v196 = vor.u32 %v194, %v195
    %v197 = vshll.u32 2131351028, %v188
    %v198 = vshrl.u32 2102212464, %v189
    %v199 = vor.u32 %v197, %v198
    %v200 = vshll.u32 2102212464, %v188
    %v201 = vshrl.u32 920167782, %v189
    %v202 = vor.u32 %v200, %v201
    %v203 = vshll.u32 920167782, %v188
    %v204 = vshrl.u32 1326507024, %v189
    %v205 = vor.u32 %v203, %v204
    %vm206 = vcmp.lt.s32.totalorder %v187, 1
    %vm207 = vcmp.lt.s32.totalorder %v187, 2
    %vm208 = vcmp.lt.s32.totalorder %v187, 3
    %vm209 = vcmp.lt.s32.totalorder %v187, 4
    %v210 = vsel %vm206, %v190, %v193
    %v211 = vsel %vm209, %v199, 2102212464
    %v212 = vsel %vm208, %v196, %v211
    %v213 = vsel %vm207, %v210, %v212
    %v214 = vsel %vm206, %v193, %v196
    %v215 = vsel %vm209, %v202, 920167782
    %v216 = vsel %vm208, %v199, %v215
    %v217 = vsel %vm207, %v214, %v216
    %v218 = vsel %vm206, %v196, %v199
    %v219 = vsel %vm209, %v205, 1326507024
    %v220 = vsel %vm208, %v202, %v219
    %v221 = vsel %vm207, %v218, %v220
    %v222 = vshll.u32 %v182, 8
    %v223 = vand.u32 %v222, 65535
    %v224 = vshrl.u32 %v222, 16
    %v225 = vand.u32 %v221, 65535
    %v226 = vshrl.u32 %v221, 16
    %v227 = vmul.u32 %v223, %v225
    %v228 = vmul.u32 %v223, %v226
    %v229 = vmul.u32 %v224, %v225
    %v230 = vmul.u32 %v224, %v226
    %v231 = vshll.u32 %v228, 16
    %v232 = vshrl.u32 %v228, 16
    %v233 = vshll.u32 %v229, 16
    %v234 = vshrl.u32 %v229, 16
    %vm235 = vc.u32 %v227, %v231
    %v236 = vsel %vm235, 1, 0
    %v237 = vadd.s32 %v227, %v231
    %v238 = vadd.s32 %v230, %v236
    %vm239 = vc.u32 %v237, %v233
    %v240 = vsel %vm239, 1, 0
    %v241 = vadd.s32 %v237, %v233
    %v242 = vadd.s32 %v238, %v240
    %v243 = vadd.s32 %v242, %v232
    %v244 = vadd.s32 %v243, %v234
    %v245 = vand.u32 %v222, 65535
    %v246 = vshrl.u32 %v222, 16
    %v247 = vand.u32 %v217, 65535
    %v248 = vshrl.u32 %v217, 16
    %v249 = vmul.u32 %v245, %v247
    %v250 = vmul.u32 %v245, %v248
    %v251 = vmul.u32 %v246, %v247
    %v252 = vmul.u32 %v246, %v248
    %v253 = vshll.u32 %v250, 16
    %v254 = vshrl.u32 %v250, 16
    %v255 = vshll.u32 %v251, 16
    %v256 = vshrl.u32 %v251, 16
    %vm257 = vc.u32 %v249, %v253
    %v258 = vsel %vm257, 1, 0
    %v259 = vadd.s32 %v249, %v253
    %v260 = vadd.s32 %v252, %v258
    %vm261 = vc.u32 %v259, %v255
    %v262 = vsel %vm261, 1, 0
    %v263 = vadd.s32 %v259, %v255
    %v264 = vadd.s32 %v260, %v262
    %v265 = vadd.s32 %v264, %v254
    %v266 = vadd.s32 %v265, %v256
    %v267 = vmul.u32 %v222, %v213
    %v268 = vadd.s32 %v244, %v263
    %vm269 = vc.u32 %v244, %v263
    %v270 = vadd.s32 %v266, 1
    %v271 = vsel %vm269, %v270, %v266
    %v272 = vadd.s32 %v267, %v271
    %v273 = vadd.s32 %v272, 536870912
    %v274 = vshrl.u32 %v273, 30
    %v275 = vshll.u32 %v274, 30
    %v276 = vsub.s32 %v272, %v275
    %vm277 = vcmp.lt.s32.totalorder %v276, 0
    %v278 = vsub.s32 0, %v276
    %v279 = vsel %vm277, %v278, %v276
    %v280 = vclz %v279
    %v281 = vsub.s32 %v280, 2
    %vm282 = vcmp.gt.s32.totalorder 0, %v281
    %v283 = vsel %vm282, 0, %v281
    %v284 = vsub.s32 32, %v283
    %v285 = vshll.u32 %v276, %v283
    %v286 = vshrl.u32 %v268, %v284
    %v287 = vor.u32 %v285, %v286
    %v288 = vsub.s32 4294967266, %v283
    %v289 = vadd.s32 %v288, 127
    %v290 = vshll.u32 %v289, 23
    %v291 = vor.u32 4788187, %v290
    %v292 = vand.u32 2147483647, %v291
    %v294 = vcvt.s32.f32 %v287
    %v295 = vmul.f32 %v294, %v292
    %v296 = vxor.u32 %v295, 2147483648
    %v297 = vsel %vm176, %v296, %v295
    %v298 = vsub.s32 4, %v274
    %v299 = vsel %vm176, %v298, %v274
    %v300 = vsel %vm175, %v127, %v297
    %v301 = vsel %vm175, 0, %v299
    %v302 = vmul.f32 %v300, %v300
    %v303 = vmul.f32 %v302, -0.001358992
    %v304 = vadd.f32 %v303, 0.041655596
    %v305 = vmul.f32 %v302, %v304
    %v306 = vadd.f32 %v305, -0.4999988
    %v307 = vmul.f32 %v302, %v306
    %v308 = vadd.f32 1.0, %v307
    %v309 = vmul.f32 %v300, %v300
    %v310 = vmul.f32 %v309, -0.00019511016
    %v311 = vadd.f32 %v310, 0.008332121
    %v312 = vmul.f32 %v309, %v311
    %v313 = vadd.f32 %v312, -0.16666654
    %v314 = vmul.f32 %v309, %v313
    %v315 = vadd.f32 %v314, 1.0
    %v316 = vmul.f32 %v315, %v300
    %vm317 = vweird.f32 %v127
    %v318 = vand.u32 %v301, 3
    %vm319 = vcmp.lt.s32.totalorder %v318, 2
    %vm320 = vcmp.eq.s32.totalorder %v318, 0
    %v321 = vxor.u32 %v316, 2147483648
    %v322 = vsel %vm320, %v308, %v321
    %vm323 = vcmp.eq.s32.totalorder %v318, 2
    %v324 = vxor.u32 %v308, 2147483648
    %v325 = vsel %vm323, %v324, %v316
    %v326 = vsel %vm319, %v322, %v325
    %v327 = vsel %vm317, nan, %v326
    %v328 = vand.u32 2147483647, %v130
    %vm329 = vcmp.le.f32.partialorder %v328, 0.7853982
    %vm330 = vcmp.lt.s32.totalorder %v130, 0
    %v331 = vand.u32 %v130, 2139095040
    %v332 = vshrl.u32 %v331, 23
    %v333 = vsub.s32 %v332, 127
    %v334 = vand.u32 2147483647, %v130
    %v335 = vand.u32 %v334, 8388607
    %v336 = vor.u32 %v335, 8388608
    %v337 = vsub.s32 0, %v336
    %v338 = vadd.s32 %v333, 1
    %vm339 = vcmp.gt.s32.totalorder %v338, 0
    %v340 = vsel %vm339, %v338, 0
    %v341 = vshrl.u32 %v340, 5
    %v342 = vand.u32 %v340, 31
    %v343 = vsub.s32 32, %v342
    %v344 = vshrl.u32 683565275, %v343
    %v345 = vshll.u32 683565275, %v342
    %v346 = vshrl.u32 2475754826, %v343
    %v347 = vor.u32 %v345, %v346
    %v348 = vshll.u32 2475754826, %v342
    %v349 = vshrl.u32 2131351028, %v343
    %v350 = vor.u32 %v348, %v349
    %v351 = vshll.u32 2131351028, %v342
    %v352 = vshrl.u32 2102212464, %v343
    %v353 = vor.u32 %v351, %v352
    %v354 = vshll.u32 2102212464, %v342
    %v355 = vshrl.u32 920167782, %v343
    %v356 = vor.u32 %v354, %v355
    %v357 = vshll.u32 920167782, %v342
    %v358 = vshrl.u32 1326507024, %v343
    %v359 = vor.u32 %v357, %v358
    %vm360 = vcmp.lt.s32.totalorder %v341, 1
    %vm361 = vcmp.lt.s32.totalorder %v341, 2
    %vm362 = vcmp.lt.s32.totalorder %v341, 3
    %vm363 = vcmp.lt.s32.totalorder %v341, 4
    %v364 = vsel %vm360, %v344, %v347
    %v365 = vsel %vm363, %v353, 2102212464
    %v366 = vsel %vm362, %v350, %v365
    %v367 = vsel %vm361, %v364, %v366
    %v368 = vsel %vm360, %v347, %v350
    %v369 = vsel %vm363, %v356, 920167782
    %v370 = vsel %vm362, %v353, %v369
    %v371 = vsel %vm361, %v368, %v370
    %v372 = vsel %vm360, %v350, %v353
    %v373 = vsel %vm363, %v359, 1326507024
    %v374 = vsel %vm362, %v356, %v373
    %v375 = vsel %vm361, %v372, %v374
    %v376 = vshll.u32 %v336, 8
    %v377 = vand.u32 %v376, 65535
    %v378 = vshrl.u32 %v376, 16
    %v379 = vand.u32 %v375, 65535
    %v380 = vshrl.u32 %v375, 16
    %v381 = vmul.u32 %v377, %v379
    %v382 = vmul.u32 %v377, %v380
    %v383 = vmul.u32 %v378, %v379
    %v384 = vmul.u32 %v378, %v380
    %v385 = vshll.u32 %v382, 16
    %v386 = vshrl.u32 %v382, 16
    %v387 = vshll.u32 %v383, 16
    %v388 = vshrl.u32 %v383, 16
    %vm389 = vc.u32 %v381, %v385
    %v390 = vsel %vm389, 1, 0
    %v391 = vadd.s32 %v381, %v385
    %v392 = vadd.s32 %v384, %v390
    %vm393 = vc.u32 %v391, %v387
    %v394 = vsel %vm393, 1, 0
    %v395 = vadd.s32 %v391, %v387
    %v396 = vadd.s32 %v392, %v394
    %v397 = vadd.s32 %v396, %v386
    %v398 = vadd.s32 %v397, %v388
    %v399 = vand.u32 %v376, 65535
    %v400 = vshrl.u32 %v376, 16
    %v401 = vand.u32 %v371, 65535
    %v402 = vshrl.u32 %v371, 16
    %v403 = vmul.u32 %v399, %v401
    %v404 = vmul.u32 %v399, %v402
    %v405 = vmul.u32 %v400, %v401
    %v406 = vmul.u32 %v400, %v402
    %v407 = vshll.u32 %v404, 16
    %v408 = vshrl.u32 %v404, 16
    %v409 = vshll.u32 %v405, 16
    %v410 = vshrl.u32 %v405, 16
    %vm411 = vc.u32 %v403, %v407
    %v412 = vsel %vm411, 1, 0
    %v413 = vadd.s32 %v403, %v407
    %v414 = vadd.s32 %v406, %v412
    %vm415 = vc.u32 %v413, %v409
    %v416 = vsel %vm415, 1, 0
    %v417 = vadd.s32 %v413, %v409
    %v418 = vadd.s32 %v414, %v416
    %v419 = vadd.s32 %v418, %v408
    %v420 = vadd.s32 %v419, %v410
    %v421 = vmul.u32 %v376, %v367
    %v422 = vadd.s32 %v398, %v417
    %vm423 = vc.u32 %v398, %v417
    %v424 = vadd.s32 %v420, 1
    %v425 = vsel %vm423, %v424, %v420
    %v426 = vadd.s32 %v421, %v425
    %v427 = vadd.s32 %v426, 536870912
    %v428 = vshrl.u32 %v427, 30
    %v429 = vshll.u32 %v428, 30
    %v430 = vsub.s32 %v426, %v429
    %vm431 = vcmp.lt.s32.totalorder %v430, 0
    %v432 = vsub.s32 0, %v430
    %v433 = vsel %vm431, %v432, %v430
    %v434 = vclz %v433
    %v435 = vsub.s32 %v434, 2
    %vm436 = vcmp.gt.s32.totalorder 0, %v435
    %v437 = vsel %vm436, 0, %v435
    %v438 = vsub.s32 32, %v437
    %v439 = vshll.u32 %v430, %v437
    %v440 = vshrl.u32 %v422, %v438
    %v441 = vor.u32 %v439, %v440
    %v442 = vsub.s32 4294967266, %v437
    %v443 = vadd.s32 %v442, 127
    %v444 = vshll.u32 %v443, 23
    %v445 = vor.u32 4788187, %v444
    %v446 = vand.u32 2147483647, %v445
    %v448 = vcvt.s32.f32 %v441
    %v449 = vmul.f32 %v448, %v446
    %v450 = vxor.u32 %v449, 2147483648
    %v451 = vsel %vm330, %v450, %v449
    %v452 = vsub.s32 4, %v428
    %v453 = vsel %vm330, %v452, %v428
    %v454 = vsel %vm329, %v130, %v451
    %v455 = vsel %vm329, 0, %v453
    %v456 = vmul.f32 %v454, %v454
    %v457 = vmul.f32 %v456, -0.001358992
    %v458 = vadd.f32 %v457, 0.041655596
    %v459 = vmul.f32 %v456, %v458
    %v460 = vadd.f32 %v459, -0.4999988
    %v461 = vmul.f32 %v456, %v460
    %v462 = vadd.f32 1.0, %v461
    %v463 = vmul.f32 %v454, %v454
    %v464 = vmul.f32 %v463, -0.00019511016
    %v465 = vadd.f32 %v464, 0.008332121
    %v466 = vmul.f32 %v463, %v465
    %v467 = vadd.f32 %v466, -0.16666654
    %v468 = vmul.f32 %v463, %v467
    %v469 = vadd.f32 %v468, 1.0
    %v470 = vmul.f32 %v469, %v454
    %vm471 = vweird.f32 %v130
    %v472 = vand.u32 %v455, 3
    %vm473 = vcmp.lt.s32.totalorder %v472, 2
    %vm474 = vcmp.eq.s32.totalorder %v472, 0
    %v475 = vxor.u32 %v470, 2147483648
    %v476 = vsel %vm474, %v462, %v475
    %vm477 = vcmp.eq.s32.totalorder %v472, 2
    %v478 = vxor.u32 %v462, 2147483648
    %v479 = vsel %vm477, %v478, %v470
    %v480 = vsel %vm473, %v476, %v479
    %v481 = vsel %vm471, nan, %v480
    %v482 = vand.u32 2147483647, %v133
    %vm483 = vcmp.le.f32.partialorder %v482, 0.7853982
    %vm484 = vcmp.lt.s32.totalorder %v133, 0
    %v485 = vand.u32 %v133, 2139095040
    %v486 = vshrl.u32 %v485, 23
    %v487 = vsub.s32 %v486, 127
    %v488 = vand.u32 2147483647, %v133
    %v489 = vand.u32 %v488, 8388607
    %v490 = vor.u32 %v489, 8388608
    %v491 = vsub.s32 0, %v490
    %v492 = vadd.s32 %v487, 1
    %vm493 = vcmp.gt.s32.totalorder %v492, 0
    %v494 = vsel %vm493, %v492, 0
    %v495 = vshrl.u32 %v494, 5
    %v496 = vand.u32 %v494, 31
    %v497 = vsub.s32 32, %v496
    %v498 = vshrl.u32 683565275, %v497
    %v499 = vshll.u32 683565275, %v496
    %v500 = vshrl.u32 2475754826, %v497
    %v501 = vor.u32 %v499, %v500
    %v502 = vshll.u32 2475754826, %v496
    %v503 = vshrl.u32 2131351028, %v497
    %v504 = vor.u32 %v502, %v503
    %v505 = vshll.u32 2131351028, %v496
    %v506 = vshrl.u32 2102212464, %v497
    %v507 = vor.u32 %v505, %v506
    %v508 = vshll.u32 2102212464, %v496
    %v509 = vshrl.u32 920167782, %v497
    %v510 = vor.u32 %v508, %v509
    %v511 = vshll.u32 920167782, %v496
    %v512 = vshrl.u32 1326507024, %v497
    %v513 = vor.u32 %v511, %v512
    %vm514 = vcmp.lt.s32.totalorder %v495, 1
    %vm515 = vcmp.lt.s32.totalorder %v495, 2
    %vm516 = vcmp.lt.s32.totalorder %v495, 3
    %vm517 = vcmp.lt.s32.totalorder %v495, 4
    %v518 = vsel %vm514, %v498, %v501
    %v519 = vsel %vm517, %v507, 2102212464
    %v520 = vsel %vm516, %v504, %v519
    %v521 = vsel %vm515, %v518, %v520
    %v522 = vsel %vm514, %v501, %v504
    %v523 = vsel %vm517, %v510, 920167782
    %v524 = vsel %vm516, %v507, %v523
    %v525 = vsel %vm515, %v522, %v524
    %v526 = vsel %vm514, %v504, %v507
    %v527 = vsel %vm517, %v513, 1326507024
    %v528 = vsel %vm516, %v510, %v527
    %v529 = vsel %vm515, %v526, %v528
    %v530 = vshll.u32 %v490, 8
    %v531 = vand.u32 %v530, 65535
    %v532 = vshrl.u32 %v530, 16
    %v533 = vand.u32 %v529, 65535
    %v534 = vshrl.u32 %v529, 16
    %v535 = vmul.u32 %v531, %v533
    %v536 = vmul.u32 %v531, %v534
    %v537 = vmul.u32 %v532, %v533
    %v538 = vmul.u32 %v532, %v534
    %v539 = vshll.u32 %v536, 16
    %v540 = vshrl.u32 %v536, 16
    %v541 = vshll.u32 %v537, 16
    %v542 = vshrl.u32 %v537, 16
    %vm543 = vc.u32 %v535, %v539
    %v544 = vsel %vm543, 1, 0
    %v545 = vadd.s32 %v535, %v539
    %v546 = vadd.s32 %v538, %v544
    %vm547 = vc.u32 %v545, %v541
    %v548 = vsel %vm547, 1, 0
    %v549 = vadd.s32 %v545, %v541
    %v550 = vadd.s32 %v546, %v548
    %v551 = vadd.s32 %v550, %v540
    %v552 = vadd.s32 %v551, %v542
    %v553 = vand.u32 %v530, 65535
    %v554 = vshrl.u32 %v530, 16
    %v555 = vand.u32 %v525, 65535
    %v556 = vshrl.u32 %v525, 16
    %v557 = vmul.u32 %v553, %v555
    %v558 = vmul.u32 %v553, %v556
    %v559 = vmul.u32 %v554, %v555
    %v560 = vmul.u32 %v554, %v556
    %v561 = vshll.u32 %v558, 16
    %v562 = vshrl.u32 %v558, 16
    %v563 = vshll.u32 %v559, 16
    %v564 = vshrl.u32 %v559, 16
    %vm565 = vc.u32 %v557, %v561
    %v566 = vsel %vm565, 1, 0
    %v567 = vadd.s32 %v557, %v561
    %v568 = vadd.s32 %v560, %v566
    %vm569 = vc.u32 %v567, %v563
    %v570 = vsel %vm569, 1, 0
    %v571 = vadd.s32 %v567, %v563
    %v572 = vadd.s32 %v568, %v570
    %v573 = vadd.s32 %v572, %v562
    %v574 = vadd.s32 %v573, %v564
    %v575 = vmul.u32 %v530, %v521
    %v576 = vadd.s32 %v552, %v571
    %vm577 = vc.u32 %v552, %v571
    %v578 = vadd.s32 %v574, 1
    %v579 = vsel %vm577, %v578, %v574
    %v580 = vadd.s32 %v575, %v579
    %v581 = vadd.s32 %v580, 536870912
    %v582 = vshrl.u32 %v581, 30
    %v583 = vshll.u32 %v582, 30
    %v584 = vsub.s32 %v580, %v583
    %vm585 = vcmp.lt.s32.totalorder %v584, 0
    %v586 = vsub.s32 0, %v584
    %v587 = vsel %vm585, %v586, %v584
    %v588 = vclz %v587
    %v589 = vsub.s32 %v588, 2
    %vm590 = vcmp.gt.s32.totalorder 0, %v589
    %v591 = vsel %vm590, 0, %v589
    %v592 = vsub.s32 32, %v591
    %v593 = vshll.u32 %v584, %v591
    %v594 = vshrl.u32 %v576, %v592
    %v595 = vor.u32 %v593, %v594
    %v596 = vsub.s32 4294967266, %v591
    %v597 = vadd.s32 %v596, 127
    %v598 = vshll.u32 %v597, 23
    %v599 = vor.u32 4788187, %v598
    %v600 = vand.u32 2147483647, %v599
    %v602 = vcvt.s32.f32 %v595
    %v603 = vmul.f32 %v602, %v600
    %v604 = vxor.u32 %v603, 2147483648
    %v605 = vsel %vm484, %v604, %v603
    %v606 = vsub.s32 4, %v582
    %v607 = vsel %vm484, %v606, %v582
    %v608 = vsel %vm483, %v133, %v605
    %v609 = vsel %vm483, 0, %v607
    %v610 = vmul.f32 %v608, %v608
    %v611 = vmul.f32 %v610, -0.001358992
    %v612 = vadd.f32 %v611, 0.041655596
    %v613 = vmul.f32 %v610, %v612
    %v614 = vadd.f32 %v613, -0.4999988
    %v615 = vmul.f32 %v610, %v614
    %v616 = vadd.f32 1.0, %v615
    %v617 = vmul.f32 %v608, %v608
    %v618 = vmul.f32 %v617, -0.00019511016
    %v619 = vadd.f32 %v618, 0.008332121
    %v620 = vmul.f32 %v617, %v619
    %v621 = vadd.f32 %v620, -0.16666654
    %v622 = vmul.f32 %v617, %v621
    %v623 = vadd.f32 %v622, 1.0
    %v624 = vmul.f32 %v623, %v608
    %vm625 = vweird.f32 %v133
    %v626 = vand.u32 %v609, 3
    %vm627 = vcmp.lt.s32.totalorder %v626, 2
    %vm628 = vcmp.eq.s32.totalorder %v626, 0
    %v629 = vxor.u32 %v624, 2147483648
    %v630 = vsel %vm628, %v616, %v629
    %vm631 = vcmp.eq.s32.totalorder %v626, 2
    %v632 = vxor.u32 %v616, 2147483648
    %v633 = vsel %vm631, %v632, %v624
    %v634 = vsel %vm627, %v630, %v633
    %v635 = vsel %vm625, nan, %v634
    %v636 = vand.u32 2147483647, %v136
    %vm637 = vcmp.le.f32.partialorder %v636, 0.7853982
    %vm638 = vcmp.lt.s32.totalorder %v136, 0
    %v639 = vand.u32 %v136, 2139095040
    %v640 = vshrl.u32 %v639, 23
    %v641 = vsub.s32 %v640, 127
    %v642 = vand.u32 2147483647, %v136
    %v643 = vand.u32 %v642, 8388607
    %v644 = vor.u32 %v643, 8388608
    %v645 = vsub.s32 0, %v644
    %v646 = vadd.s32 %v641, 1
    %vm647 = vcmp.gt.s32.totalorder %v646, 0
    %v648 = vsel %vm647, %v646, 0
    %v649 = vshrl.u32 %v648, 5
    %v650 = vand.u32 %v648, 31
    %v651 = vsub.s32 32, %v650
    %v652 = vshrl.u32 683565275, %v651
    %v653 = vshll.u32 683565275, %v650
    %v654 = vshrl.u32 2475754826, %v651
    %v655 = vor.u32 %v653, %v654
    %v656 = vshll.u32 2475754826, %v650
    %v657 = vshrl.u32 2131351028, %v651
    %v658 = vor.u32 %v656, %v657
    %v659 = vshll.u32 2131351028, %v650
    %v660 = vshrl.u32 2102212464, %v651
    %v661 = vor.u32 %v659, %v660
    %v662 = vshll.u32 2102212464, %v650
    %v663 = vshrl.u32 920167782, %v651
    %v664 = vor.u32 %v662, %v663
    %v665 = vshll.u32 920167782, %v650
    %v666 = vshrl.u32 1326507024, %v651
    %v667 = vor.u32 %v665, %v666
    %vm668 = vcmp.lt.s32.totalorder %v649, 1
    %vm669 = vcmp.lt.s32.totalorder %v649, 2
    %vm670 = vcmp.lt.s32.totalorder %v649, 3
    %vm671 = vcmp.lt.s32.totalorder %v649, 4
    %v672 = vsel %vm668, %v652, %v655
    %v673 = vsel %vm671, %v661, 2102212464
    %v674 = vsel %vm670, %v658, %v673
    %v675 = vsel %vm669, %v672, %v674
    %v676 = vsel %vm668, %v655, %v658
    %v677 = vsel %vm671, %v664, 920167782
    %v678 = vsel %vm670, %v661, %v677
    %v679 = vsel %vm669, %v676, %v678
    %v680 = vsel %vm668, %v658, %v661
    %v681 = vsel %vm671, %v667, 1326507024
    %v682 = vsel %vm670, %v664, %v681
    %v683 = vsel %vm669, %v680, %v682
    %v684 = vshll.u32 %v644, 8
    %v685 = vand.u32 %v684, 65535
    %v686 = vshrl.u32 %v684, 16
    %v687 = vand.u32 %v683, 65535
    %v688 = vshrl.u32 %v683, 16
    %v689 = vmul.u32 %v685, %v687
    %v690 = vmul.u32 %v685, %v688
    %v691 = vmul.u32 %v686, %v687
    %v692 = vmul.u32 %v686, %v688
    %v693 = vshll.u32 %v690, 16
    %v694 = vshrl.u32 %v690, 16
    %v695 = vshll.u32 %v691, 16
    %v696 = vshrl.u32 %v691, 16
    %vm697 = vc.u32 %v689, %v693
    %v698 = vsel %vm697, 1, 0
    %v699 = vadd.s32 %v689, %v693
    %v700 = vadd.s32 %v692, %v698
    %vm701 = vc.u32 %v699, %v695
    %v702 = vsel %vm701, 1, 0
    %v703 = vadd.s32 %v699, %v695
    %v704 = vadd.s32 %v700, %v702
    %v705 = vadd.s32 %v704, %v694
    %v706 = vadd.s32 %v705, %v696
    %v707 = vand.u32 %v684, 65535
    %v708 = vshrl.u32 %v684, 16
    %v709 = vand.u32 %v679, 65535
    %v710 = vshrl.u32 %v679, 16
    %v711 = vmul.u32 %v707, %v709
    %v712 = vmul.u32 %v707, %v710
    %v713 = vmul.u32 %v708, %v709
    %v714 = vmul.u32 %v708, %v710
    %v715 = vshll.u32 %v712, 16
    %v716 = vshrl.u32 %v712, 16
    %v717 = vshll.u32 %v713, 16
    %v718 = vshrl.u32 %v713, 16
    %vm719 = vc.u32 %v711, %v715
    %v720 = vsel %vm719, 1, 0
    %v721 = vadd.s32 %v711, %v715
    %v722 = vadd.s32 %v714, %v720
    %vm723 = vc.u32 %v721, %v717
    %v724 = vsel %vm723, 1, 0
    %v725 = vadd.s32 %v721, %v717
    %v726 = vadd.s32 %v722, %v724
    %v727 = vadd.s32 %v726, %v716
    %v728 = vadd.s32 %v727, %v718
    %v729 = vmul.u32 %v684, %v675
    %v730 = vadd.s32 %v706, %v725
    %vm731 = vc.u32 %v706, %v725
    %v732 = vadd.s32 %v728, 1
    %v733 = vsel %vm731, %v732, %v728
    %v734 = vadd.s32 %v729, %v733
    %v735 = vadd.s32 %v734, 536870912
    %v736 = vshrl.u32 %v735, 30
    %v737 = vshll.u32 %v736, 30
    %v738 = vsub.s32 %v734, %v737
    %vm739 = vcmp.lt.s32.totalorder %v738, 0
    %v740 = vsub.s32 0, %v738
    %v741 = vsel %vm739, %v740, %v738
    %v742 = vclz %v741
    %v743 = vsub.s32 %v742, 2
    %vm744 = vcmp.gt.s32.totalorder 0, %v743
    %v745 = vsel %vm744, 0, %v743
    %v746 = vsub.s32 32, %v745
    %v747 = vshll.u32 %v738, %v745
    %v748 = vshrl.u32 %v730, %v746
    %v749 = vor.u32 %v747, %v748
    %v750 = vsub.s32 4294967266, %v745
    %v751 = vadd.s32 %v750, 127
    %v752 = vshll.u32 %v751, 23
    %v753 = vor.u32 4788187, %v752
    %v754 = vand.u32 2147483647, %v753
    %v756 = vcvt.s32.f32 %v749
    %v757 = vmul.f32 %v756, %v754
    %v758 = vxor.u32 %v757, 2147483648
    %v759 = vsel %vm638, %v758, %v757
    %v760 = vsub.s32 4, %v736
    %v761 = vsel %vm638, %v760, %v736
    %v762 = vsel %vm637, %v136, %v759
    %v763 = vsel %vm637, 0, %v761
    %v764 = vmul.f32 %v762, %v762
    %v765 = vmul.f32 %v764, -0.001358992
    %v766 = vadd.f32 %v765, 0.041655596
    %v767 = vmul.f32 %v764, %v766
    %v768 = vadd.f32 %v767, -0.4999988
    %v769 = vmul.f32 %v764, %v768
    %v770 = vadd.f32 1.0, %v769
    %v771 = vmul.f32 %v762, %v762
    %v772 = vmul.f32 %v771, -0.00019511016
    %v773 = vadd.f32 %v772, 0.008332121
    %v774 = vmul.f32 %v771, %v773
    %v775 = vadd.f32 %v774, -0.16666654
    %v776 = vmul.f32 %v771, %v775
    %v777 = vadd.f32 %v776, 1.0
    %v778 = vmul.f32 %v777, %v762
    %vm779 = vweird.f32 %v136
    %v780 = vand.u32 %v763, 3
    %vm781 = vcmp.lt.s32.totalorder %v780, 2
    %vm782 = vcmp.eq.s32.totalorder %v780, 0
    %v783 = vxor.u32 %v778, 2147483648
    %v784 = vsel %vm782, %v770, %v783
    %vm785 = vcmp.eq.s32.totalorder %v780, 2
    %v786 = vxor.u32 %v770, 2147483648
    %v787 = vsel %vm785, %v786, %v778
    %v788 = vsel %vm781, %v784, %v787
    %v789 = vsel %vm779, nan, %v788
    %v790 = vand.u32 2147483647, %v139
    %vm791 = vcmp.le.f32.partialorder %v790, 0.7853982
    %vm792 = vcmp.lt.s32.totalorder %v139, 0
    %v793 = vand.u32 %v139, 2139095040
    %v794 = vshrl.u32 %v793, 23
    %v795 = vsub.s32 %v794, 127
    %v796 = vand.u32 2147483647, %v139
    %v797 = vand.u32 %v796, 8388607
    %v798 = vor.u32 %v797, 8388608
    %v799 = vsub.s32 0, %v798
    %v800 = vadd.s32 %v795, 1
    %vm801 = vcmp.gt.s32.totalorder %v800, 0
    %v802 = vsel %vm801, %v800, 0
    %v803 = vshrl.u32 %v802, 5
    %v804 = vand.u32 %v802, 31
    %v805 = vsub.s32 32, %v804
    %v806 = vshrl.u32 683565275, %v805
    %v807 = vshll.u32 683565275, %v804
    %v808 = vshrl.u32 2475754826, %v805
    %v809 = vor.u32 %v807, %v808
    %v810 = vshll.u32 2475754826, %v804
    %v811 = vshrl.u32 2131351028, %v805
    %v812 = vor.u32 %v810, %v811
    %v813 = vshll.u32 2131351028, %v804
    %v814 = vshrl.u32 2102212464, %v805
    %v815 = vor.u32 %v813, %v814
    %v816 = vshll.u32 2102212464, %v804
    %v817 = vshrl.u32 920167782, %v805
    %v818 = vor.u32 %v816, %v817
    %v819 = vshll.u32 920167782, %v804
    %v820 = vshrl.u32 1326507024, %v805
    %v821 = vor.u32 %v819, %v820
    %vm822 = vcmp.lt.s32.totalorder %v803, 1
    %vm823 = vcmp.lt.s32.totalorder %v803, 2
    %vm824 = vcmp.lt.s32.totalorder %v803, 3
    %vm825 = vcmp.lt.s32.totalorder %v803, 4
    %v826 = vsel %vm822, %v806, %v809
    %v827 = vsel %vm825, %v815, 2102212464
    %v828 = vsel %vm824, %v812, %v827
    %v829 = vsel %vm823, %v826, %v828
    %v830 = vsel %vm822, %v809, %v812
    %v831 = vsel %vm825, %v818, 920167782
    %v832 = vsel %vm824, %v815, %v831
    %v833 = vsel %vm823, %v830, %v832
    %v834 = vsel %vm822, %v812, %v815
    %v835 = vsel %vm825, %v821, 1326507024
    %v836 = vsel %vm824, %v818, %v835
    %v837 = vsel %vm823, %v834, %v836
    %v838 = vshll.u32 %v798, 8
    %v839 = vand.u32 %v838, 65535
    %v840 = vshrl.u32 %v838, 16
    %v841 = vand.u32 %v837, 65535
    %v842 = vshrl.u32 %v837, 16
    %v843 = vmul.u32 %v839, %v841
    %v844 = vmul.u32 %v839, %v842
    %v845 = vmul.u32 %v840, %v841
    %v846 = vmul.u32 %v840, %v842
    %v847 = vshll.u32 %v844, 16
    %v848 = vshrl.u32 %v844, 16
    %v849 = vshll.u32 %v845, 16
    %v850 = vshrl.u32 %v845, 16
    %vm851 = vc.u32 %v843, %v847
    %v852 = vsel %vm851, 1, 0
    %v853 = vadd.s32 %v843, %v847
    %v854 = vadd.s32 %v846, %v852
    %vm855 = vc.u32 %v853, %v849
    %v856 = vsel %vm855, 1, 0
    %v857 = vadd.s32 %v853, %v849
    %v858 = vadd.s32 %v854, %v856
    %v859 = vadd.s32 %v858, %v848
    %v860 = vadd.s32 %v859, %v850
    %v861 = vand.u32 %v838, 65535
    %v862 = vshrl.u32 %v838, 16
    %v863 = vand.u32 %v833, 65535
    %v864 = vshrl.u32 %v833, 16
    %v865 = vmul.u32 %v861, %v863
    %v866 = vmul.u32 %v861, %v864
    %v867 = vmul.u32 %v862, %v863
    %v868 = vmul.u32 %v862, %v864
    %v869 = vshll.u32 %v866, 16
    %v870 = vshrl.u32 %v866, 16
    %v871 = vshll.u32 %v867, 16
    %v872 = vshrl.u32 %v867, 16
    %vm873 = vc.u32 %v865, %v869
    %v874 = vsel %vm873, 1, 0
    %v875 = vadd.s32 %v865, %v869
    %v876 = vadd.s32 %v868, %v874
    %vm877 = vc.u32 %v875, %v871
    %v878 = vsel %vm877, 1, 0
    %v879 = vadd.s32 %v875, %v871
    %v880 = vadd.s32 %v876, %v878
    %v881 = vadd.s32 %v880, %v870
    %v882 = vadd.s32 %v881, %v872
    %v883 = vmul.u32 %v838, %v829
    %v884 = vadd.s32 %v860, %v879
    %vm885 = vc.u32 %v860, %v879
    %v886 = vadd.s32 %v882, 1
    %v887 = vsel %vm885, %v886, %v882
    %v888 = vadd.s32 %v883, %v887
    %v889 = vadd.s32 %v888, 536870912
    %v890 = vshrl.u32 %v889, 30
    %v891 = vshll.u32 %v890, 30
    %v892 = vsub.s32 %v888, %v891
    %vm893 = vcmp.lt.s32.totalorder %v892, 0
    %v894 = vsub.s32 0, %v892
    %v895 = vsel %vm893, %v894, %v892
    %v896 = vclz %v895
    %v897 = vsub.s32 %v896, 2
    %vm898 = vcmp.gt.s32.totalorder 0, %v897
    %v899 = vsel %vm898, 0, %v897
    %v900 = vsub.s32 32, %v899
    %v901 = vshll.u32 %v892, %v899
    %v902 = vshrl.u32 %v884, %v900
    %v903 = vor.u32 %v901, %v902
    %v904 = vsub.s32 4294967266, %v899
    %v905 = vadd.s32 %v904, 127
    %v906 = vshll.u32 %v905, 23
    %v907 = vor.u32 4788187, %v906
    %v908 = vand.u32 2147483647, %v907
    %v910 = vcvt.s32.f32 %v903
    %v911 = vmul.f32 %v910, %v908
    %v912 = vxor.u32 %v911, 2147483648
    %v913 = vsel %vm792, %v912, %v911
    %v914 = vsub.s32 4, %v890
    %v915 = vsel %vm792, %v914, %v890
    %v916 = vsel %vm791, %v139, %v913
    %v917 = vsel %vm791, 0, %v915
    %v918 = vmul.f32 %v916, %v916
    %v919 = vmul.f32 %v918, -0.001358992
    %v920 = vadd.f32 %v919, 0.041655596
    %v921 = vmul.f32 %v918, %v920
    %v922 = vadd.f32 %v921, -0.4999988
    %v923 = vmul.f32 %v918, %v922
    %v924 = vadd.f32 1.0, %v923
    %v925 = vmul.f32 %v916, %v916
    %v926 = vmul.f32 %v925, -0.00019511016
    %v927 = vadd.f32 %v926, 0.008332121
    %v928 = vmul.f32 %v925, %v927
    %v929 = vadd.f32 %v928, -0.16666654
    %v930 = vmul.f32 %v925, %v929
    %v931 = vadd.f32 %v930, 1.0
    %v932 = vmul.f32 %v931, %v916
    %vm933 = vweird.f32 %v139
    %v934 = vand.u32 %v917, 3
    %vm935 = vcmp.lt.s32.totalorder %v934, 2
    %vm936 = vcmp.eq.s32.totalorder %v934, 0
    %v937 = vxor.u32 %v932, 2147483648
    %v938 = vsel %vm936, %v924, %v937
    %vm939 = vcmp.eq.s32.totalorder %v934, 2
    %v940 = vxor.u32 %v924, 2147483648
    %v941 = vsel %vm939, %v940, %v932
    %v942 = vsel %vm935, %v938, %v941
    %v943 = vsel %vm933, nan, %v942
    %v944 = vand.u32 2147483647, %v142
    %vm945 = vcmp.le.f32.partialorder %v944, 0.7853982
    %vm946 = vcmp.lt.s32.totalorder %v142, 0
    %v947 = vand.u32 %v142, 2139095040
    %v948 = vshrl.u32 %v947, 23
    %v949 = vsub.s32 %v948, 127
    %v950 = vand.u32 2147483647, %v142
    %v951 = vand.u32 %v950, 8388607
    %v952 = vor.u32 %v951, 8388608
    %v953 = vsub.s32 0, %v952
    %v954 = vadd.s32 %v949, 1
    %vm955 = vcmp.gt.s32.totalorder %v954, 0
    %v956 = vsel %vm955, %v954, 0
    %v957 = vshrl.u32 %v956, 5
    %v958 = vand.u32 %v956, 31
    %v959 = vsub.s32 32, %v958
    %v960 = vshrl.u32 683565275, %v959
    %v961 = vshll.u32 683565275, %v958
    %v962 = vshrl.u32 2475754826, %v959
    %v963 = vor.u32 %v961, %v962
    %v964 = vshll.u32 2475754826, %v958
    %v965 = vshrl.u32 2131351028, %v959
    %v966 = vor.u32 %v964, %v965
    %v967 = vshll.u32 2131351028, %v958
    %v968 = vshrl.u32 2102212464, %v959
    %v969 = vor.u32 %v967, %v968
    %v970 = vshll.u32 2102212464, %v958
    %v971 = vshrl.u32 920167782, %v959
    %v972 = vor.u32 %v970, %v971
    %v973 = vshll.u32 920167782, %v958
    %v974 = vshrl.u32 1326507024, %v959
    %v975 = vor.u32 %v973, %v974
    %vm976 = vcmp.lt.s32.totalorder %v957, 1
    %vm977 = vcmp.lt.s32.totalorder %v957, 2
    %vm978 = vcmp.lt.s32.totalorder %v957, 3
    %vm979 = vcmp.lt.s32.totalorder %v957, 4
    %v980 = vsel %vm976, %v960, %v963
    %v981 = vsel %vm979, %v969, 2102212464
    %v982 = vsel %vm978, %v966, %v981
    %v983 = vsel %vm977, %v980, %v982
    %v984 = vsel %vm976, %v963, %v966
    %v985 = vsel %vm979, %v972, 920167782
    %v986 = vsel %vm978, %v969, %v985
    %v987 = vsel %vm977, %v984, %v986
    %v988 = vsel %vm976, %v966, %v969
    %v989 = vsel %vm979, %v975, 1326507024
    %v990 = vsel %vm978, %v972, %v989
    %v991 = vsel %vm977, %v988, %v990
    %v992 = vshll.u32 %v952, 8
    %v993 = vand.u32 %v992, 65535
    %v994 = vshrl.u32 %v992, 16
    %v995 = vand.u32 %v991, 65535
    %v996 = vshrl.u32 %v991, 16
    %v997 = vmul.u32 %v993, %v995
    %v998 = vmul.u32 %v993, %v996
    %v999 = vmul.u32 %v994, %v995
    %v1000 = vmul.u32 %v994, %v996
    %v1001 = vshll.u32 %v998, 16
    %v1002 = vshrl.u32 %v998, 16
    %v1003 = vshll.u32 %v999, 16
    %v1004 = vshrl.u32 %v999, 16
    %vm1005 = vc.u32 %v997, %v1001
    %v1006 = vsel %vm1005, 1, 0
    %v1007 = vadd.s32 %v997, %v1001
    %v1008 = vadd.s32 %v1000, %v1006
    %vm1009 = vc.u32 %v1007, %v1003
    %v1010 = vsel %vm1009, 1, 0
    %v1011 = vadd.s32 %v1007, %v1003
    %v1012 = vadd.s32 %v1008, %v1010
    %v1013 = vadd.s32 %v1012, %v1002
    %v1014 = vadd.s32 %v1013, %v1004
    %v1015 = vand.u32 %v992, 65535
    %v1016 = vshrl.u32 %v992, 16
    %v1017 = vand.u32 %v987, 65535
    %v1018 = vshrl.u32 %v987, 16
    %v1019 = vmul.u32 %v1015, %v1017
    %v1020 = vmul.u32 %v1015, %v1018
    %v1021 = vmul.u32 %v1016, %v1017
    %v1022 = vmul.u32 %v1016, %v1018
    %v1023 = vshll.u32 %v1020, 16
    %v1024 = vshrl.u32 %v1020, 16
    %v1025 = vshll.u32 %v1021, 16
    %v1026 = vshrl.u32 %v1021, 16
    %vm1027 = vc.u32 %v1019, %v1023
    %v1028 = vsel %vm1027, 1, 0
    %v1029 = vadd.s32 %v1019, %v1023
    %v1030 = vadd.s32 %v1022, %v1028
    %vm1031 = vc.u32 %v1029, %v1025
    %v1032 = vsel %vm1031, 1, 0
    %v1033 = vadd.s32 %v1029, %v1025
    %v1034 = vadd.s32 %v1030, %v1032
    %v1035 = vadd.s32 %v1034, %v1024
    %v1036 = vadd.s32 %v1035, %v1026
    %v1037 = vmul.u32 %v992, %v983
    %v1038 = vadd.s32 %v1014, %v1033
    %vm1039 = vc.u32 %v1014, %v1033
    %v1040 = vadd.s32 %v1036, 1
    %v1041 = vsel %vm1039, %v1040, %v1036
    %v1042 = vadd.s32 %v1037, %v1041
    %v1043 = vadd.s32 %v1042, 536870912
    %v1044 = vshrl.u32 %v1043, 30
    %v1045 = vshll.u32 %v1044, 30
    %v1046 = vsub.s32 %v1042, %v1045
    %vm1047 = vcmp.lt.s32.totalorder %v1046, 0
    %v1048 = vsub.s32 0, %v1046
    %v1049 = vsel %vm1047, %v1048, %v1046
    %v1050 = vclz %v1049
    %v1051 = vsub.s32 %v1050, 2
    %vm1052 = vcmp.gt.s32.totalorder 0, %v1051
    %v1053 = vsel %vm1052, 0, %v1051
    %v1054 = vsub.s32 32, %v1053
    %v1055 = vshll.u32 %v1046, %v1053
    %v1056 = vshrl.u32 %v1038, %v1054
    %v1057 = vor.u32 %v1055, %v1056
    %v1058 = vsub.s32 4294967266, %v1053
    %v1059 = vadd.s32 %v1058, 127
    %v1060 = vshll.u32 %v1059, 23
    %v1061 = vor.u32 4788187, %v1060
    %v1062 = vand.u32 2147483647, %v1061
    %v1064 = vcvt.s32.f32 %v1057
    %v1065 = vmul.f32 %v1064, %v1062
    %v1066 = vxor.u32 %v1065, 2147483648
    %v1067 = vsel %vm946, %v1066, %v1065
    %v1068 = vsub.s32 4, %v1044
    %v1069 = vsel %vm946, %v1068, %v1044
    %v1070 = vsel %vm945, %v142, %v1067
    %v1071 = vsel %vm945, 0, %v1069
    %v1072 = vmul.f32 %v1070, %v1070
    %v1073 = vmul.f32 %v1072, -0.001358992
    %v1074 = vadd.f32 %v1073, 0.041655596
    %v1075 = vmul.f32 %v1072, %v1074
    %v1076 = vadd.f32 %v1075, -0.4999988
    %v1077 = vmul.f32 %v1072, %v1076
    %v1078 = vadd.f32 1.0, %v1077
    %v1079 = vmul.f32 %v1070, %v1070
    %v1080 = vmul.f32 %v1079, -0.00019511016
    %v1081 = vadd.f32 %v1080, 0.008332121
    %v1082 = vmul.f32 %v1079, %v1081
    %v1083 = vadd.f32 %v1082, -0.16666654
    %v1084 = vmul.f32 %v1079, %v1083
    %v1085 = vadd.f32 %v1084, 1.0
    %v1086 = vmul.f32 %v1085, %v1070
    %vm1087 = vweird.f32 %v142
    %v1088 = vand.u32 %v1071, 3
    %vm1089 = vcmp.lt.s32.totalorder %v1088, 2
    %vm1090 = vcmp.eq.s32.totalorder %v1088, 0
    %v1091 = vxor.u32 %v1086, 2147483648
    %v1092 = vsel %vm1090, %v1078, %v1091
    %vm1093 = vcmp.eq.s32.totalorder %v1088, 2
    %v1094 = vxor.u32 %v1078, 2147483648
    %v1095 = vsel %vm1093, %v1094, %v1086
    %v1096 = vsel %vm1089, %v1092, %v1095
    %v1097 = vsel %vm1087, nan, %v1096
    %v1098 = vand.u32 2147483647, %v145
    %vm1099 = vcmp.le.f32.partialorder %v1098, 0.7853982
    %vm1100 = vcmp.lt.s32.totalorder %v145, 0
    %v1101 = vand.u32 %v145, 2139095040
    %v1102 = vshrl.u32 %v1101, 23
    %v1103 = vsub.s32 %v1102, 127
    %v1104 = vand.u32 2147483647, %v145
    %v1105 = vand.u32 %v1104, 8388607
    %v1106 = vor.u32 %v1105, 8388608
    %v1107 = vsub.s32 0, %v1106
    %v1108 = vadd.s32 %v1103, 1
    %vm1109 = vcmp.gt.s32.totalorder %v1108, 0
    %v1110 = vsel %vm1109, %v1108, 0
    %v1111 = vshrl.u32 %v1110, 5
    %v1112 = vand.u32 %v1110, 31
    %v1113 = vsub.s32 32, %v1112
    %v1114 = vshrl.u32 683565275, %v1113
    %v1115 = vshll.u32 683565275, %v1112
    %v1116 = vshrl.u32 2475754826, %v1113
    %v1117 = vor.u32 %v1115, %v1116
    %v1118 = vshll.u32 2475754826, %v1112
    %v1119 = vshrl.u32 2131351028, %v1113
    %v1120 = vor.u32 %v1118, %v1119
    %v1121 = vshll.u32 2131351028, %v1112
    %v1122 = vshrl.u32 2102212464, %v1113
    %v1123 = vor.u32 %v1121, %v1122
    %v1124 = vshll.u32 2102212464, %v1112
    %v1125 = vshrl.u32 920167782, %v1113
    %v1126 = vor.u32 %v1124, %v1125
    %v1127 = vshll.u32 920167782, %v1112
    %v1128 = vshrl.u32 1326507024, %v1113
    %v1129 = vor.u32 %v1127, %v1128
    %vm1130 = vcmp.lt.s32.totalorder %v1111, 1
    %vm1131 = vcmp.lt.s32.totalorder %v1111, 2
    %vm1132 = vcmp.lt.s32.totalorder %v1111, 3
    %vm1133 = vcmp.lt.s32.totalorder %v1111, 4
    %v1134 = vsel %vm1130, %v1114, %v1117
    %v1135 = vsel %vm1133, %v1123, 2102212464
    %v1136 = vsel %vm1132, %v1120, %v1135
    %v1137 = vsel %vm1131, %v1134, %v1136
    %v1138 = vsel %vm1130, %v1117, %v1120
    %v1139 = vsel %vm1133, %v1126, 920167782
    %v1140 = vsel %vm1132, %v1123, %v1139
    %v1141 = vsel %vm1131, %v1138, %v1140
    %v1142 = vsel %vm1130, %v1120, %v1123
    %v1143 = vsel %vm1133, %v1129, 1326507024
    %v1144 = vsel %vm1132, %v1126, %v1143
    %v1145 = vsel %vm1131, %v1142, %v1144
    %v1146 = vshll.u32 %v1106, 8
    %v1147 = vand.u32 %v1146, 65535
    %v1148 = vshrl.u32 %v1146, 16
    %v1149 = vand.u32 %v1145, 65535
    %v1150 = vshrl.u32 %v1145, 16
    %v1151 = vmul.u32 %v1147, %v1149
    %v1152 = vmul.u32 %v1147, %v1150
    %v1153 = vmul.u32 %v1148, %v1149
    %v1154 = vmul.u32 %v1148, %v1150
    %v1155 = vshll.u32 %v1152, 16
    %v1156 = vshrl.u32 %v1152, 16
    %v1157 = vshll.u32 %v1153, 16
    %v1158 = vshrl.u32 %v1153, 16
    %vm1159 = vc.u32 %v1151, %v1155
    %v1160 = vsel %vm1159, 1, 0
    %v1161 = vadd.s32 %v1151, %v1155
    %v1162 = vadd.s32 %v1154, %v1160
    %vm1163 = vc.u32 %v1161, %v1157
    %v1164 = vsel %vm1163, 1, 0
    %v1165 = vadd.s32 %v1161, %v1157
    %v1166 = vadd.s32 %v1162, %v1164
    %v1167 = vadd.s32 %v1166, %v1156
    %v1168 = vadd.s32 %v1167, %v1158
    %v1169 = vand.u32 %v1146, 65535
    %v1170 = vshrl.u32 %v1146, 16
    %v1171 = vand.u32 %v1141, 65535
    %v1172 = vshrl.u32 %v1141, 16
    %v1173 = vmul.u32 %v1169, %v1171
    %v1174 = vmul.u32 %v1169, %v1172
    %v1175 = vmul.u32 %v1170, %v1171
    %v1176 = vmul.u32 %v1170, %v1172
    %v1177 = vshll.u32 %v1174, 16
    %v1178 = vshrl.u32 %v1174, 16
    %v1179 = vshll.u32 %v1175, 16
    %v1180 = vshrl.u32 %v1175, 16
    %vm1181 = vc.u32 %v1173, %v1177
    %v1182 = vsel %vm1181, 1, 0
    %v1183 = vadd.s32 %v1173, %v1177
    %v1184 = vadd.s32 %v1176, %v1182
    %vm1185 = vc.u32 %v1183, %v1179
    %v1186 = vsel %vm1185, 1, 0
    %v1187 = vadd.s32 %v1183, %v1179
    %v1188 = vadd.s32 %v1184, %v1186
    %v1189 = vadd.s32 %v1188, %v1178
    %v1190 = vadd.s32 %v1189, %v1180
    %v1191 = vmul.u32 %v1146, %v1137
    %v1192 = vadd.s32 %v1168, %v1187
    %vm1193 = vc.u32 %v1168, %v1187
    %v1194 = vadd.s32 %v1190, 1
    %v1195 = vsel %vm1193, %v1194, %v1190
    %v1196 = vadd.s32 %v1191, %v1195
    %v1197 = vadd.s32 %v1196, 536870912
    %v1198 = vshrl.u32 %v1197, 30
    %v1199 = vshll.u32 %v1198, 30
    %v1200 = vsub.s32 %v1196, %v1199
    %vm1201 = vcmp.lt.s32.totalorder %v1200, 0
    %v1202 = vsub.s32 0, %v1200
    %v1203 = vsel %vm1201, %v1202, %v1200
    %v1204 = vclz %v1203
    %v1205 = vsub.s32 %v1204, 2
    %vm1206 = vcmp.gt.s32.totalorder 0, %v1205
    %v1207 = vsel %vm1206, 0, %v1205
    %v1208 = vsub.s32 32, %v1207
    %v1209 = vshll.u32 %v1200, %v1207
    %v1210 = vshrl.u32 %v1192, %v1208
    %v1211 = vor.u32 %v1209, %v1210
    %v1212 = vsub.s32 4294967266, %v1207
    %v1213 = vadd.s32 %v1212, 127
    %v1214 = vshll.u32 %v1213, 23
    %v1215 = vor.u32 4788187, %v1214
    %v1216 = vand.u32 2147483647, %v1215
    %v1218 = vcvt.s32.f32 %v1211
    %v1219 = vmul.f32 %v1218, %v1216
    %v1220 = vxor.u32 %v1219, 2147483648
    %v1221 = vsel %vm1100, %v1220, %v1219
    %v1222 = vsub.s32 4, %v1198
    %v1223 = vsel %vm1100, %v1222, %v1198
    %v1224 = vsel %vm1099, %v145, %v1221
    %v1225 = vsel %vm1099, 0, %v1223
    %v1226 = vmul.f32 %v1224, %v1224
    %v1227 = vmul.f32 %v1226, -0.001358992
    %v1228 = vadd.f32 %v1227, 0.041655596
    %v1229 = vmul.f32 %v1226, %v1228
    %v1230 = vadd.f32 %v1229, -0.4999988
    %v1231 = vmul.f32 %v1226, %v1230
    %v1232 = vadd.f32 1.0, %v1231
    %v1233 = vmul.f32 %v1224, %v1224
    %v1234 = vmul.f32 %v1233, -0.00019511016
    %v1235 = vadd.f32 %v1234, 0.008332121
    %v1236 = vmul.f32 %v1233, %v1235
    %v1237 = vadd.f32 %v1236, -0.16666654
    %v1238 = vmul.f32 %v1233, %v1237
    %v1239 = vadd.f32 %v1238, 1.0
    %v1240 = vmul.f32 %v1239, %v1224
    %vm1241 = vweird.f32 %v145
    %v1242 = vand.u32 %v1225, 3
    %vm1243 = vcmp.lt.s32.totalorder %v1242, 2
    %vm1244 = vcmp.eq.s32.totalorder %v1242, 0
    %v1245 = vxor.u32 %v1240, 2147483648
    %v1246 = vsel %vm1244, %v1232, %v1245
    %vm1247 = vcmp.eq.s32.totalorder %v1242, 2
    %v1248 = vxor.u32 %v1232, 2147483648
    %v1249 = vsel %vm1247, %v1248, %v1240
    %v1250 = vsel %vm1243, %v1246, %v1249
    %v1251 = vsel %vm1241, nan, %v1250
    %v1252 = vand.u32 2147483647, %v148
    %vm1253 = vcmp.le.f32.partialorder %v1252, 0.7853982
    %vm1254 = vcmp.lt.s32.totalorder %v148, 0
    %v1255 = vand.u32 %v148, 2139095040
    %v1256 = vshrl.u32 %v1255, 23
    %v1257 = vsub.s32 %v1256, 127
    %v1258 = vand.u32 2147483647, %v148
    %v1259 = vand.u32 %v1258, 8388607
    %v1260 = vor.u32 %v1259, 8388608
    %v1261 = vsub.s32 0, %v1260
    %v1262 = vadd.s32 %v1257, 1
    %vm1263 = vcmp.gt.s32.totalorder %v1262, 0
    %v1264 = vsel %vm1263, %v1262, 0
    %v1265 = vshrl.u32 %v1264, 5
    %v1266 = vand.u32 %v1264, 31
    %v1267 = vsub.s32 32, %v1266
    %v1268 = vshrl.u32 683565275, %v1267
    %v1269 = vshll.u32 683565275, %v1266
    %v1270 = vshrl.u32 2475754826, %v1267
    %v1271 = vor.u32 %v1269, %v1270
    %v1272 = vshll.u32 2475754826, %v1266
    %v1273 = vshrl.u32 2131351028, %v1267
    %v1274 = vor.u32 %v1272, %v1273
    %v1275 = vshll.u32 2131351028, %v1266
    %v1276 = vshrl.u32 2102212464, %v1267
    %v1277 = vor.u32 %v1275, %v1276
    %v1278 = vshll.u32 2102212464, %v1266
    %v1279 = vshrl.u32 920167782, %v1267
    %v1280 = vor.u32 %v1278, %v1279
    %v1281 = vshll.u32 920167782, %v1266
    %v1282 = vshrl.u32 1326507024, %v1267
    %v1283 = vor.u32 %v1281, %v1282
    %vm1284 = vcmp.lt.s32.totalorder %v1265, 1
    %vm1285 = vcmp.lt.s32.totalorder %v1265, 2
    %vm1286 = vcmp.lt.s32.totalorder %v1265, 3
    %vm1287 = vcmp.lt.s32.totalorder %v1265, 4
    %v1288 = vsel %vm1284, %v1268, %v1271
    %v1289 = vsel %vm1287, %v1277, 2102212464
    %v1290 = vsel %vm1286, %v1274, %v1289
    %v1291 = vsel %vm1285, %v1288, %v1290
    %v1292 = vsel %vm1284, %v1271, %v1274
    %v1293 = vsel %vm1287, %v1280, 920167782
    %v1294 = vsel %vm1286, %v1277, %v1293
    %v1295 = vsel %vm1285, %v1292, %v1294
    %v1296 = vsel %vm1284, %v1274, %v1277
    %v1297 = vsel %vm1287, %v1283, 1326507024
    %v1298 = vsel %vm1286, %v1280, %v1297
    %v1299 = vsel %vm1285, %v1296, %v1298
    %v1300 = vshll.u32 %v1260, 8
    %v1301 = vand.u32 %v1300, 65535
    %v1302 = vshrl.u32 %v1300, 16
    %v1303 = vand.u32 %v1299, 65535
    %v1304 = vshrl.u32 %v1299, 16
    %v1305 = vmul.u32 %v1301, %v1303
    %v1306 = vmul.u32 %v1301, %v1304
    %v1307 = vmul.u32 %v1302, %v1303
    %v1308 = vmul.u32 %v1302, %v1304
    %v1309 = vshll.u32 %v1306, 16
    %v1310 = vshrl.u32 %v1306, 16
    %v1311 = vshll.u32 %v1307, 16
    %v1312 = vshrl.u32 %v1307, 16
    %vm1313 = vc.u32 %v1305, %v1309
    %v1314 = vsel %vm1313, 1, 0
    %v1315 = vadd.s32 %v1305, %v1309
    %v1316 = vadd.s32 %v1308, %v1314
    %vm1317 = vc.u32 %v1315, %v1311
    %v1318 = vsel %vm1317, 1, 0
    %v1319 = vadd.s32 %v1315, %v1311
    %v1320 = vadd.s32 %v1316, %v1318
    %v1321 = vadd.s32 %v1320, %v1310
    %v1322 = vadd.s32 %v1321, %v1312
    %v1323 = vand.u32 %v1300, 65535
    %v1324 = vshrl.u32 %v1300, 16
    %v1325 = vand.u32 %v1295, 65535
    %v1326 = vshrl.u32 %v1295, 16
    %v1327 = vmul.u32 %v1323, %v1325
    %v1328 = vmul.u32 %v1323, %v1326
    %v1329 = vmul.u32 %v1324, %v1325
    %v1330 = vmul.u32 %v1324, %v1326
    %v1331 = vshll.u32 %v1328, 16
    %v1332 = vshrl.u32 %v1328, 16
    %v1333 = vshll.u32 %v1329, 16
    %v1334 = vshrl.u32 %v1329, 16
    %vm1335 = vc.u32 %v1327, %v1331
    %v1336 = vsel %vm1335, 1, 0
    %v1337 = vadd.s32 %v1327, %v1331
    %v1338 = vadd.s32 %v1330, %v1336
    %vm1339 = vc.u32 %v1337, %v1333
    %v1340 = vsel %vm1339, 1, 0
    %v1341 = vadd.s32 %v1337, %v1333
    %v1342 = vadd.s32 %v1338, %v1340
    %v1343 = vadd.s32 %v1342, %v1332
    %v1344 = vadd.s32 %v1343, %v1334
    %v1345 = vmul.u32 %v1300, %v1291
    %v1346 = vadd.s32 %v1322, %v1341
    %vm1347 = vc.u32 %v1322, %v1341
    %v1348 = vadd.s32 %v1344, 1
    %v1349 = vsel %vm1347, %v1348, %v1344
    %v1350 = vadd.s32 %v1345, %v1349
    %v1351 = vadd.s32 %v1350, 536870912
    %v1352 = vshrl.u32 %v1351, 30
    %v1353 = vshll.u32 %v1352, 30
    %v1354 = vsub.s32 %v1350, %v1353
    %vm1355 = vcmp.lt.s32.totalorder %v1354, 0
    %v1356 = vsub.s32 0, %v1354
    %v1357 = vsel %vm1355, %v1356, %v1354
    %v1358 = vclz %v1357
    %v1359 = vsub.s32 %v1358, 2
    %vm1360 = vcmp.gt.s32.totalorder 0, %v1359
    %v1361 = vsel %vm1360, 0, %v1359
    %v1362 = vsub.s32 32, %v1361
    %v1363 = vshll.u32 %v1354, %v1361
    %v1364 = vshrl.u32 %v1346, %v1362
    %v1365 = vor.u32 %v1363, %v1364
    %v1366 = vsub.s32 4294967266, %v1361
    %v1367 = vadd.s32 %v1366, 127
    %v1368 = vshll.u32 %v1367, 23
    %v1369 = vor.u32 4788187, %v1368
    %v1370 = vand.u32 2147483647, %v1369
    %v1372 = vcvt.s32.f32 %v1365
    %v1373 = vmul.f32 %v1372, %v1370
    %v1374 = vxor.u32 %v1373, 2147483648
    %v1375 = vsel %vm1254, %v1374, %v1373
    %v1376 = vsub.s32 4, %v1352
    %v1377 = vsel %vm1254, %v1376, %v1352
    %v1378 = vsel %vm1253, %v148, %v1375
    %v1379 = vsel %vm1253, 0, %v1377
    %v1380 = vmul.f32 %v1378, %v1378
    %v1381 = vmul.f32 %v1380, -0.001358992
    %v1382 = vadd.f32 %v1381, 0.041655596
    %v1383 = vmul.f32 %v1380, %v1382
    %v1384 = vadd.f32 %v1383, -0.4999988
    %v1385 = vmul.f32 %v1380, %v1384
    %v1386 = vadd.f32 1.0, %v1385
    %v1387 = vmul.f32 %v1378, %v1378
    %v1388 = vmul.f32 %v1387, -0.00019511016
    %v1389 = vadd.f32 %v1388, 0.008332121
    %v1390 = vmul.f32 %v1387, %v1389
    %v1391 = vadd.f32 %v1390, -0.16666654
    %v1392 = vmul.f32 %v1387, %v1391
    %v1393 = vadd.f32 %v1392, 1.0
    %v1394 = vmul.f32 %v1393, %v1378
    %vm1395 = vweird.f32 %v148
    %v1396 = vand.u32 %v1379, 3
    %vm1397 = vcmp.lt.s32.totalorder %v1396, 2
    %vm1398 = vcmp.eq.s32.totalorder %v1396, 0
    %v1399 = vxor.u32 %v1394, 2147483648
    %v1400 = vsel %vm1398, %v1386, %v1399
    %vm1401 = vcmp.eq.s32.totalorder %v1396, 2
    %v1402 = vxor.u32 %v1386, 2147483648
    %v1403 = vsel %vm1401, %v1402, %v1394
    %v1404 = vsel %vm1397, %v1400, %v1403
    %v1405 = vsel %vm1395, nan, %v1404
    %v1406 = vmul.f32 %v166, %v327
    %v1407 = vmul.f32 %v167, %v481
    %v1408 = vmul.f32 %v168, %v635
    %v1409 = vmul.f32 %v169, %v789
    %v1410 = vmul.f32 %v170, %v943
    %v1411 = vmul.f32 %v171, %v1097
    %v1412 = vmul.f32 %v172, %v1251
    %v1413 = vmul.f32 %v173, %v1405
    %v1414 = vand.u32 2147483647, %v127
    %vm1415 = vcmp.le.f32.partialorder %v1414, 0.7853982
    %vm1416 = vcmp.lt.s32.totalorder %v127, 0
    %v1417 = vand.u32 %v127, 2139095040
    %v1418 = vshrl.u32 %v1417, 23
    %v1419 = vsub.s32 %v1418, 127
    %v1420 = vand.u32 2147483647, %v127
    %v1421 = vand.u32 %v1420, 8388607
    %v1422 = vor.u32 %v1421, 8388608
    %v1423 = vsub.s32 0, %v1422
    %v1424 = vadd.s32 %v1419, 1
    %vm1425 = vcmp.gt.s32.totalorder %v1424, 0
    %v1426 = vsel %vm1425, %v1424, 0
    %v1427 = vshrl.u32 %v1426, 5
    %v1428 = vand.u32 %v1426, 31
    %v1429 = vsub.s32 32, %v1428
    %v1430 = vshrl.u32 683565275, %v1429
    %v1431 = vshll.u32 683565275, %v1428
    %v1432 = vshrl.u32 2475754826, %v1429
    %v1433 = vor.u32 %v1431, %v1432
    %v1434 = vshll.u32 2475754826, %v1428
    %v1435 = vshrl.u32 2131351028, %v1429
    %v1436 = vor.u32 %v1434, %v1435
    %v1437 = vshll.u32 2131351028, %v1428
    %v1438 = vshrl.u32 2102212464, %v1429
    %v1439 = vor.u32 %v1437, %v1438
    %v1440 = vshll.u32 2102212464, %v1428
    %v1441 = vshrl.u32 920167782, %v1429
    %v1442 = vor.u32 %v1440, %v1441
    %v1443 = vshll.u32 920167782, %v1428
    %v1444 = vshrl.u32 1326507024, %v1429
    %v1445 = vor.u32 %v1443, %v1444
    %vm1446 = vcmp.lt.s32.totalorder %v1427, 1
    %vm1447 = vcmp.lt.s32.totalorder %v1427, 2
    %vm1448 = vcmp.lt.s32.totalorder %v1427, 3
    %vm1449 = vcmp.lt.s32.totalorder %v1427, 4
    %v1450 = vsel %vm1446, %v1430, %v1433
    %v1451 = vsel %vm1449, %v1439, 2102212464
    %v1452 = vsel %vm1448, %v1436, %v1451
    %v1453 = vsel %vm1447, %v1450, %v1452
    %v1454 = vsel %vm1446, %v1433, %v1436
    %v1455 = vsel %vm1449, %v1442, 920167782
    %v1456 = vsel %vm1448, %v1439, %v1455
    %v1457 = vsel %vm1447, %v1454, %v1456
    %v1458 = vsel %vm1446, %v1436, %v1439
    %v1459 = vsel %vm1449, %v1445, 1326507024
    %v1460 = vsel %vm1448, %v1442, %v1459
    %v1461 = vsel %vm1447, %v1458, %v1460
    %v1462 = vshll.u32 %v1422, 8
    %v1463 = vand.u32 %v1462, 65535
    %v1464 = vshrl.u32 %v1462, 16
    %v1465 = vand.u32 %v1461, 65535
    %v1466 = vshrl.u32 %v1461, 16
    %v1467 = vmul.u32 %v1463, %v1465
    %v1468 = vmul.u32 %v1463, %v1466
    %v1469 = vmul.u32 %v1464, %v1465
    %v1470 = vmul.u32 %v1464, %v1466
    %v1471 = vshll.u32 %v1468, 16
    %v1472 = vshrl.u32 %v1468, 16
    %v1473 = vshll.u32 %v1469, 16
    %v1474 = vshrl.u32 %v1469, 16
    %vm1475 = vc.u32 %v1467, %v1471
    %v1476 = vsel %vm1475, 1, 0
    %v1477 = vadd.s32 %v1467, %v1471
    %v1478 = vadd.s32 %v1470, %v1476
    %vm1479 = vc.u32 %v1477, %v1473
    %v1480 = vsel %vm1479, 1, 0
    %v1481 = vadd.s32 %v1477, %v1473
    %v1482 = vadd.s32 %v1478, %v1480
    %v1483 = vadd.s32 %v1482, %v1472
    %v1484 = vadd.s32 %v1483, %v1474
    %v1485 = vand.u32 %v1462, 65535
    %v1486 = vshrl.u32 %v1462, 16
    %v1487 = vand.u32 %v1457, 65535
    %v1488 = vshrl.u32 %v1457, 16
    %v1489 = vmul.u32 %v1485, %v1487
    %v1490 = vmul.u32 %v1485, %v1488
    %v1491 = vmul.u32 %v1486, %v1487
    %v1492 = vmul.u32 %v1486, %v1488
    %v1493 = vshll.u32 %v1490, 16
    %v1494 = vshrl.u32 %v1490, 16
    %v1495 = vshll.u32 %v1491, 16
    %v1496 = vshrl.u32 %v1491, 16
    %vm1497 = vc.u32 %v1489, %v1493
    %v1498 = vsel %vm1497, 1, 0
    %v1499 = vadd.s32 %v1489, %v1493
    %v1500 = vadd.s32 %v1492, %v1498
    %vm1501 = vc.u32 %v1499, %v1495
    %v1502 = vsel %vm1501, 1, 0
    %v1503 = vadd.s32 %v1499, %v1495
    %v1504 = vadd.s32 %v1500, %v1502
    %v1505 = vadd.s32 %v1504, %v1494
    %v1506 = vadd.s32 %v1505, %v1496
    %v1507 = vmul.u32 %v1462, %v1453
    %v1508 = vadd.s32 %v1484, %v1503
    %vm1509 = vc.u32 %v1484, %v1503
    %v1510 = vadd.s32 %v1506, 1
    %v1511 = vsel %vm1509, %v1510, %v1506
    %v1512 = vadd.s32 %v1507, %v1511
    %v1513 = vadd.s32 %v1512, 536870912
    %v1514 = vshrl.u32 %v1513, 30
    %v1515 = vshll.u32 %v1514, 30
    %v1516 = vsub.s32 %v1512, %v1515
    %vm1517 = vcmp.lt.s32.totalorder %v1516, 0
    %v1518 = vsub.s32 0, %v1516
    %v1519 = vsel %vm1517, %v1518, %v1516
    %v1520 = vclz %v1519
    %v1521 = vsub.s32 %v1520, 2
    %vm1522 = vcmp.gt.s32.totalorder 0, %v1521
    %v1523 = vsel %vm1522, 0, %v1521
    %v1524 = vsub.s32 32, %v1523
    %v1525 = vshll.u32 %v1516, %v1523
    %v1526 = vshrl.u32 %v1508, %v1524
    %v1527 = vor.u32 %v1525, %v1526
    %v1528 = vsub.s32 4294967266, %v1523
    %v1529 = vadd.s32 %v1528, 127
    %v1530 = vshll.u32 %v1529, 23
    %v1531 = vor.u32 4788187, %v1530
    %v1532 = vand.u32 2147483647, %v1531
    %v1534 = vcvt.s32.f32 %v1527
    %v1535 = vmul.f32 %v1534, %v1532
    %v1536 = vxor.u32 %v1535, 2147483648
    %v1537 = vsel %vm1416, %v1536, %v1535
    %v1538 = vsub.s32 4, %v1514
    %v1539 = vsel %vm1416, %v1538, %v1514
    %v1540 = vsel %vm1415, %v127, %v1537
    %v1541 = vsel %vm1415, 0, %v1539
    %v1542 = vmul.f32 %v1540, %v1540
    %v1543 = vmul.f32 %v1542, -0.001358992
    %v1544 = vadd.f32 %v1543, 0.041655596
    %v1545 = vmul.f32 %v1542, %v1544
    %v1546 = vadd.f32 %v1545, -0.4999988
    %v1547 = vmul.f32 %v1542, %v1546
    %v1548 = vadd.f32 1.0, %v1547
    %v1549 = vmul.f32 %v1540, %v1540
    %v1550 = vmul.f32 %v1549, -0.00019511016
    %v1551 = vadd.f32 %v1550, 0.008332121
    %v1552 = vmul.f32 %v1549, %v1551
    %v1553 = vadd.f32 %v1552, -0.16666654
    %v1554 = vmul.f32 %v1549, %v1553
    %v1555 = vadd.f32 %v1554, 1.0
    %v1556 = vmul.f32 %v1555, %v1540
    %vm1557 = vweird.f32 %v127
    %v1558 = vadd.s32 %v1541, 3
    %v1559 = vand.u32 %v1558, 3
    %vm1560 = vcmp.lt.s32.totalorder %v1559, 2
    %vm1561 = vcmp.eq.s32.totalorder %v1559, 0
    %v1562 = vxor.u32 %v1556, 2147483648
    %v1563 = vsel %vm1561, %v1548, %v1562
    %vm1564 = vcmp.eq.s32.totalorder %v1559, 2
    %v1565 = vxor.u32 %v1548, 2147483648
    %v1566 = vsel %vm1564, %v1565, %v1556
    %v1567 = vsel %vm1560, %v1563, %v1566
    %v1568 = vsel %vm1557, nan, %v1567
    %v1569 = vand.u32 2147483647, %v130
    %vm1570 = vcmp.le.f32.partialorder %v1569, 0.7853982
    %vm1571 = vcmp.lt.s32.totalorder %v130, 0
    %v1572 = vand.u32 %v130, 2139095040
    %v1573 = vshrl.u32 %v1572, 23
    %v1574 = vsub.s32 %v1573, 127
    %v1575 = vand.u32 2147483647, %v130
    %v1576 = vand.u32 %v1575, 8388607
    %v1577 = vor.u32 %v1576, 8388608
    %v1578 = vsub.s32 0, %v1577
    %v1579 = vadd.s32 %v1574, 1
    %vm1580 = vcmp.gt.s32.totalorder %v1579, 0
    %v1581 = vsel %vm1580, %v1579, 0
    %v1582 = vshrl.u32 %v1581, 5
    %v1583 = vand.u32 %v1581, 31
    %v1584 = vsub.s32 32, %v1583
    %v1585 = vshrl.u32 683565275, %v1584
    %v1586 = vshll.u32 683565275, %v1583
    %v1587 = vshrl.u32 2475754826, %v1584
    %v1588 = vor.u32 %v1586, %v1587
    %v1589 = vshll.u32 2475754826, %v1583
    %v1590 = vshrl.u32 2131351028, %v1584
    %v1591 = vor.u32 %v1589, %v1590
    %v1592 = vshll.u32 2131351028, %v1583
    %v1593 = vshrl.u32 2102212464, %v1584
    %v1594 = vor.u32 %v1592, %v1593
    %v1595 = vshll.u32 2102212464, %v1583
    %v1596 = vshrl.u32 920167782, %v1584
    %v1597 = vor.u32 %v1595, %v1596
    %v1598 = vshll.u32 920167782, %v1583
    %v1599 = vshrl.u32 1326507024, %v1584
    %v1600 = vor.u32 %v1598, %v1599
    %vm1601 = vcmp.lt.s32.totalorder %v1582, 1
    %vm1602 = vcmp.lt.s32.totalorder %v1582, 2
    %vm1603 = vcmp.lt.s32.totalorder %v1582, 3
    %vm1604 = vcmp.lt.s32.totalorder %v1582, 4
    %v1605 = vsel %vm1601, %v1585, %v1588
    %v1606 = vsel %vm1604, %v1594, 2102212464
    %v1607 = vsel %vm1603, %v1591, %v1606
    %v1608 = vsel %vm1602, %v1605, %v1607
    %v1609 = vsel %vm1601, %v1588, %v1591
    %v1610 = vsel %vm1604, %v1597, 920167782
    %v1611 = vsel %vm1603, %v1594, %v1610
    %v1612 = vsel %vm1602, %v1609, %v1611
    %v1613 = vsel %vm1601, %v1591, %v1594
    %v1614 = vsel %vm1604, %v1600, 1326507024
    %v1615 = vsel %vm1603, %v1597, %v1614
    %v1616 = vsel %vm1602, %v1613, %v1615
    %v1617 = vshll.u32 %v1577, 8
    %v1618 = vand.u32 %v1617, 65535
    %v1619 = vshrl.u32 %v1617, 16
    %v1620 = vand.u32 %v1616, 65535
    %v1621 = vshrl.u32 %v1616, 16
    %v1622 = vmul.u32 %v1618, %v1620
    %v1623 = vmul.u32 %v1618, %v1621
    %v1624 = vmul.u32 %v1619, %v1620
    %v1625 = vmul.u32 %v1619, %v1621
    %v1626 = vshll.u32 %v1623, 16
    %v1627 = vshrl.u32 %v1623, 16
    %v1628 = vshll.u32 %v1624, 16
    %v1629 = vshrl.u32 %v1624, 16
    %vm1630 = vc.u32 %v1622, %v1626
    %v1631 = vsel %vm1630, 1, 0
    %v1632 = vadd.s32 %v1622, %v1626
    %v1633 = vadd.s32 %v1625, %v1631
    %vm1634 = vc.u32 %v1632, %v1628
    %v1635 = vsel %vm1634, 1, 0
    %v1636 = vadd.s32 %v1632, %v1628
    %v1637 = vadd.s32 %v1633, %v1635
    %v1638 = vadd.s32 %v1637, %v1627
    %v1639 = vadd.s32 %v1638, %v1629
    %v1640 = vand.u32 %v1617, 65535
    %v1641 = vshrl.u32 %v1617, 16
    %v1642 = vand.u32 %v1612, 65535
    %v1643 = vshrl.u32 %v1612, 16
    %v1644 = vmul.u32 %v1640, %v1642
    %v1645 = vmul.u32 %v1640, %v1643
    %v1646 = vmul.u32 %v1641, %v1642
    %v1647 = vmul.u32 %v1641, %v1643
    %v1648 = vshll.u32 %v1645, 16
    %v1649 = vshrl.u32 %v1645, 16
    %v1650 = vshll.u32 %v1646, 16
    %v1651 = vshrl.u32 %v1646, 16
    %vm1652 = vc.u32 %v1644, %v1648
    %v1653 = vsel %vm1652, 1, 0
    %v1654 = vadd.s32 %v1644, %v1648
    %v1655 = vadd.s32 %v1647, %v1653
    %vm1656 = vc.u32 %v1654, %v1650
    %v1657 = vsel %vm1656, 1, 0
    %v1658 = vadd.s32 %v1654, %v1650
    %v1659 = vadd.s32 %v1655, %v1657
    %v1660 = vadd.s32 %v1659, %v1649
    %v1661 = vadd.s32 %v1660, %v1651
    %v1662 = vmul.u32 %v1617, %v1608
    %v1663 = vadd.s32 %v1639, %v1658
    %vm1664 = vc.u32 %v1639, %v1658
    %v1665 = vadd.s32 %v1661, 1
    %v1666 = vsel %vm1664, %v1665, %v1661
    %v1667 = vadd.s32 %v1662, %v1666
    %v1668 = vadd.s32 %v1667, 536870912
    %v1669 = vshrl.u32 %v1668, 30
    %v1670 = vshll.u32 %v1669, 30
    %v1671 = vsub.s32 %v1667, %v1670
    %vm1672 = vcmp.lt.s32.totalorder %v1671, 0
    %v1673 = vsub.s32 0, %v1671
    %v1674 = vsel %vm1672, %v1673, %v1671
    %v1675 = vclz %v1674
    %v1676 = vsub.s32 %v1675, 2
    %vm1677 = vcmp.gt.s32.totalorder 0, %v1676
    %v1678 = vsel %vm1677, 0, %v1676
    %v1679 = vsub.s32 32, %v1678
    %v1680 = vshll.u32 %v1671, %v1678
    %v1681 = vshrl.u32 %v1663, %v1679
    %v1682 = vor.u32 %v1680, %v1681
    %v1683 = vsub.s32 4294967266, %v1678
    %v1684 = vadd.s32 %v1683, 127
    %v1685 = vshll.u32 %v1684, 23
    %v1686 = vor.u32 4788187, %v1685
    %v1687 = vand.u32 2147483647, %v1686
    %v1689 = vcvt.s32.f32 %v1682
    %v1690 = vmul.f32 %v1689, %v1687
    %v1691 = vxor.u32 %v1690, 2147483648
    %v1692 = vsel %vm1571, %v1691, %v1690
    %v1693 = vsub.s32 4, %v1669
    %v1694 = vsel %vm1571, %v1693, %v1669
    %v1695 = vsel %vm1570, %v130, %v1692
    %v1696 = vsel %vm1570, 0, %v1694
    %v1697 = vmul.f32 %v1695, %v1695
    %v1698 = vmul.f32 %v1697, -0.001358992
    %v1699 = vadd.f32 %v1698, 0.041655596
    %v1700 = vmul.f32 %v1697, %v1699
    %v1701 = vadd.f32 %v1700, -0.4999988
    %v1702 = vmul.f32 %v1697, %v1701
    %v1703 = vadd.f32 1.0, %v1702
    %v1704 = vmul.f32 %v1695, %v1695
    %v1705 = vmul.f32 %v1704, -0.00019511016
    %v1706 = vadd.f32 %v1705, 0.008332121
    %v1707 = vmul.f32 %v1704, %v1706
    %v1708 = vadd.f32 %v1707, -0.16666654
    %v1709 = vmul.f32 %v1704, %v1708
    %v1710 = vadd.f32 %v1709, 1.0
    %v1711 = vmul.f32 %v1710, %v1695
    %vm1712 = vweird.f32 %v130
    %v1713 = vadd.s32 %v1696, 3
    %v1714 = vand.u32 %v1713, 3
    %vm1715 = vcmp.lt.s32.totalorder %v1714, 2
    %vm1716 = vcmp.eq.s32.totalorder %v1714, 0
    %v1717 = vxor.u32 %v1711, 2147483648
    %v1718 = vsel %vm1716, %v1703, %v1717
    %vm1719 = vcmp.eq.s32.totalorder %v1714, 2
    %v1720 = vxor.u32 %v1703, 2147483648
    %v1721 = vsel %vm1719, %v1720, %v1711
    %v1722 = vsel %vm1715, %v1718, %v1721
    %v1723 = vsel %vm1712, nan, %v1722
    %v1724 = vand.u32 2147483647, %v133
    %vm1725 = vcmp.le.f32.partialorder %v1724, 0.7853982
    %vm1726 = vcmp.lt.s32.totalorder %v133, 0
    %v1727 = vand.u32 %v133, 2139095040
    %v1728 = vshrl.u32 %v1727, 23
    %v1729 = vsub.s32 %v1728, 127
    %v1730 = vand.u32 2147483647, %v133
    %v1731 = vand.u32 %v1730, 8388607
    %v1732 = vor.u32 %v1731, 8388608
    %v1733 = vsub.s32 0, %v1732
    %v1734 = vadd.s32 %v1729, 1
    %vm1735 = vcmp.gt.s32.totalorder %v1734, 0
    %v1736 = vsel %vm1735, %v1734, 0
    %v1737 = vshrl.u32 %v1736, 5
    %v1738 = vand.u32 %v1736, 31
    %v1739 = vsub.s32 32, %v1738
    %v1740 = vshrl.u32 683565275, %v1739
    %v1741 = vshll.u32 683565275, %v1738
    %v1742 = vshrl.u32 2475754826, %v1739
    %v1743 = vor.u32 %v1741, %v1742
    %v1744 = vshll.u32 2475754826, %v1738
    %v1745 = vshrl.u32 2131351028, %v1739
    %v1746 = vor.u32 %v1744, %v1745
    %v1747 = vshll.u32 2131351028, %v1738
    %v1748 = vshrl.u32 2102212464, %v1739
    %v1749 = vor.u32 %v1747, %v1748
    %v1750 = vshll.u32 2102212464, %v1738
    %v1751 = vshrl.u32 920167782, %v1739
    %v1752 = vor.u32 %v1750, %v1751
    %v1753 = vshll.u32 920167782, %v1738
    %v1754 = vshrl.u32 1326507024, %v1739
    %v1755 = vor.u32 %v1753, %v1754
    %vm1756 = vcmp.lt.s32.totalorder %v1737, 1
    %vm1757 = vcmp.lt.s32.totalorder %v1737, 2
    %vm1758 = vcmp.lt.s32.totalorder %v1737, 3
    %vm1759 = vcmp.lt.s32.totalorder %v1737, 4
    %v1760 = vsel %vm1756, %v1740, %v1743
    %v1761 = vsel %vm1759, %v1749, 2102212464
    %v1762 = vsel %vm1758, %v1746, %v1761
    %v1763 = vsel %vm1757, %v1760, %v1762
    %v1764 = vsel %vm1756, %v1743, %v1746
    %v1765 = vsel %vm1759, %v1752, 920167782
    %v1766 = vsel %vm1758, %v1749, %v1765
    %v1767 = vsel %vm1757, %v1764, %v1766
    %v1768 = vsel %vm1756, %v1746, %v1749
    %v1769 = vsel %vm1759, %v1755, 1326507024
    %v1770 = vsel %vm1758, %v1752, %v1769
    %v1771 = vsel %vm1757, %v1768, %v1770
    %v1772 = vshll.u32 %v1732, 8
    %v1773 = vand.u32 %v1772, 65535
    %v1774 = vshrl.u32 %v1772, 16
    %v1775 = vand.u32 %v1771, 65535
    %v1776 = vshrl.u32 %v1771, 16
    %v1777 = vmul.u32 %v1773, %v1775
    %v1778 = vmul.u32 %v1773, %v1776
    %v1779 = vmul.u32 %v1774, %v1775
    %v1780 = vmul.u32 %v1774, %v1776
    %v1781 = vshll.u32 %v1778, 16
    %v1782 = vshrl.u32 %v1778, 16
    %v1783 = vshll.u32 %v1779, 16
    %v1784 = vshrl.u32 %v1779, 16
    %vm1785 = vc.u32 %v1777, %v1781
    %v1786 = vsel %vm1785, 1, 0
    %v1787 = vadd.s32 %v1777, %v1781
    %v1788 = vadd.s32 %v1780, %v1786
    %vm1789 = vc.u32 %v1787, %v1783
    %v1790 = vsel %vm1789, 1, 0
    %v1791 = vadd.s32 %v1787, %v1783
    %v1792 = vadd.s32 %v1788, %v1790
    %v1793 = vadd.s32 %v1792, %v1782
    %v1794 = vadd.s32 %v1793, %v1784
    %v1795 = vand.u32 %v1772, 65535
    %v1796 = vshrl.u32 %v1772, 16
    %v1797 = vand.u32 %v1767, 65535
    %v1798 = vshrl.u32 %v1767, 16
    %v1799 = vmul.u32 %v1795, %v1797
    %v1800 = vmul.u32 %v1795, %v1798
    %v1801 = vmul.u32 %v1796, %v1797
    %v1802 = vmul.u32 %v1796, %v1798
    %v1803 = vshll.u32 %v1800, 16
    %v1804 = vshrl.u32 %v1800, 16
    %v1805 = vshll.u32 %v1801, 16
    %v1806 = vshrl.u32 %v1801, 16
    %vm1807 = vc.u32 %v1799, %v1803
    %v1808 = vsel %vm1807, 1, 0
    %v1809 = vadd.s32 %v1799, %v1803
    %v1810 = vadd.s32 %v1802, %v1808
    %vm1811 = vc.u32 %v1809, %v1805
    %v1812 = vsel %vm1811, 1, 0
    %v1813 = vadd.s32 %v1809, %v1805
    %v1814 = vadd.s32 %v1810, %v1812
    %v1815 = vadd.s32 %v1814, %v1804
    %v1816 = vadd.s32 %v1815, %v1806
    %v1817 = vmul.u32 %v1772, %v1763
    %v1818 = vadd.s32 %v1794, %v1813
    %vm1819 = vc.u32 %v1794, %v1813
    %v1820 = vadd.s32 %v1816, 1
    %v1821 = vsel %vm1819, %v1820, %v1816
    %v1822 = vadd.s32 %v1817, %v1821
    %v1823 = vadd.s32 %v1822, 536870912
    %v1824 = vshrl.u32 %v1823, 30
    %v1825 = vshll.u32 %v1824, 30
    %v1826 = vsub.s32 %v1822, %v1825
    %vm1827 = vcmp.lt.s32.totalorder %v1826, 0
    %v1828 = vsub.s32 0, %v1826
    %v1829 = vsel %vm1827, %v1828, %v1826
    %v1830 = vclz %v1829
    %v1831 = vsub.s32 %v1830, 2
    %vm1832 = vcmp.gt.s32.totalorder 0, %v1831
    %v1833 = vsel %vm1832, 0, %v1831
    %v1834 = vsub.s32 32, %v1833
    %v1835 = vshll.u32 %v1826, %v1833
    %v1836 = vshrl.u32 %v1818, %v1834
    %v1837 = vor.u32 %v1835, %v1836
    %v1838 = vsub.s32 4294967266, %v1833
    %v1839 = vadd.s32 %v1838, 127
    %v1840 = vshll.u32 %v1839, 23
    %v1841 = vor.u32 4788187, %v1840
    %v1842 = vand.u32 2147483647, %v1841
    %v1844 = vcvt.s32.f32 %v1837
    %v1845 = vmul.f32 %v1844, %v1842
    %v1846 = vxor.u32 %v1845, 2147483648
    %v1847 = vsel %vm1726, %v1846, %v1845
    %v1848 = vsub.s32 4, %v1824
    %v1849 = vsel %vm1726, %v1848, %v1824
    %v1850 = vsel %vm1725, %v133, %v1847
    %v1851 = vsel %vm1725, 0, %v1849
    %v1852 = vmul.f32 %v1850, %v1850
    %v1853 = vmul.f32 %v1852, -0.001358992
    %v1854 = vadd.f32 %v1853, 0.041655596
    %v1855 = vmul.f32 %v1852, %v1854
    %v1856 = vadd.f32 %v1855, -0.4999988
    %v1857 = vmul.f32 %v1852, %v1856
    %v1858 = vadd.f32 1.0, %v1857
    %v1859 = vmul.f32 %v1850, %v1850
    %v1860 = vmul.f32 %v1859, -0.00019511016
    %v1861 = vadd.f32 %v1860, 0.008332121
    %v1862 = vmul.f32 %v1859, %v1861
    %v1863 = vadd.f32 %v1862, -0.16666654
    %v1864 = vmul.f32 %v1859, %v1863
    %v1865 = vadd.f32 %v1864, 1.0
    %v1866 = vmul.f32 %v1865, %v1850
    %vm1867 = vweird.f32 %v133
    %v1868 = vadd.s32 %v1851, 3
    %v1869 = vand.u32 %v1868, 3
    %vm1870 = vcmp.lt.s32.totalorder %v1869, 2
    %vm1871 = vcmp.eq.s32.totalorder %v1869, 0
    %v1872 = vxor.u32 %v1866, 2147483648
    %v1873 = vsel %vm1871, %v1858, %v1872
    %vm1874 = vcmp.eq.s32.totalorder %v1869, 2
    %v1875 = vxor.u32 %v1858, 2147483648
    %v1876 = vsel %vm1874, %v1875, %v1866
    %v1877 = vsel %vm1870, %v1873, %v1876
    %v1878 = vsel %vm1867, nan, %v1877
    %v1879 = vand.u32 2147483647, %v136
    %vm1880 = vcmp.le.f32.partialorder %v1879, 0.7853982
    %vm1881 = vcmp.lt.s32.totalorder %v136, 0
    %v1882 = vand.u32 %v136, 2139095040
    %v1883 = vshrl.u32 %v1882, 23
    %v1884 = vsub.s32 %v1883, 127
    %v1885 = vand.u32 2147483647, %v136
    %v1886 = vand.u32 %v1885, 8388607
    %v1887 = vor.u32 %v1886, 8388608
    %v1888 = vsub.s32 0, %v1887
    %v1889 = vadd.s32 %v1884, 1
    %vm1890 = vcmp.gt.s32.totalorder %v1889, 0
    %v1891 = vsel %vm1890, %v1889, 0
    %v1892 = vshrl.u32 %v1891, 5
    %v1893 = vand.u32 %v1891, 31
    %v1894 = vsub.s32 32, %v1893
    %v1895 = vshrl.u32 683565275, %v1894
    %v1896 = vshll.u32 683565275, %v1893
    %v1897 = vshrl.u32 2475754826, %v1894
    %v1898 = vor.u32 %v1896, %v1897
    %v1899 = vshll.u32 2475754826, %v1893
    %v1900 = vshrl.u32 2131351028, %v1894
    %v1901 = vor.u32 %v1899, %v1900
    %v1902 = vshll.u32 2131351028, %v1893
    %v1903 = vshrl.u32 2102212464, %v1894
    %v1904 = vor.u32 %v1902, %v1903
    %v1905 = vshll.u32 2102212464, %v1893
    %v1906 = vshrl.u32 920167782, %v1894
    %v1907 = vor.u32 %v1905, %v1906
    %v1908 = vshll.u32 920167782, %v1893
    %v1909 = vshrl.u32 1326507024, %v1894
    %v1910 = vor.u32 %v1908, %v1909
    %vm1911 = vcmp.lt.s32.totalorder %v1892, 1
    %vm1912 = vcmp.lt.s32.totalorder %v1892, 2
    %vm1913 = vcmp.lt.s32.totalorder %v1892, 3
    %vm1914 = vcmp.lt.s32.totalorder %v1892, 4
    %v1915 = vsel %vm1911, %v1895, %v1898
    %v1916 = vsel %vm1914, %v1904, 2102212464
    %v1917 = vsel %vm1913, %v1901, %v1916
    %v1918 = vsel %vm1912, %v1915, %v1917
    %v1919 = vsel %vm1911, %v1898, %v1901
    %v1920 = vsel %vm1914, %v1907, 920167782
    %v1921 = vsel %vm1913, %v1904, %v1920
    %v1922 = vsel %vm1912, %v1919, %v1921
    %v1923 = vsel %vm1911, %v1901, %v1904
    %v1924 = vsel %vm1914, %v1910, 1326507024
    %v1925 = vsel %vm1913, %v1907, %v1924
    %v1926 = vsel %vm1912, %v1923, %v1925
    %v1927 = vshll.u32 %v1887, 8
    %v1928 = vand.u32 %v1927, 65535
    %v1929 = vshrl.u32 %v1927, 16
    %v1930 = vand.u32 %v1926, 65535
    %v1931 = vshrl.u32 %v1926, 16
    %v1932 = vmul.u32 %v1928, %v1930
    %v1933 = vmul.u32 %v1928, %v1931
    %v1934 = vmul.u32 %v1929, %v1930
    %v1935 = vmul.u32 %v1929, %v1931
    %v1936 = vshll.u32 %v1933, 16
    %v1937 = vshrl.u32 %v1933, 16
    %v1938 = vshll.u32 %v1934, 16
    %v1939 = vshrl.u32 %v1934, 16
    %vm1940 = vc.u32 %v1932, %v1936
    %v1941 = vsel %vm1940, 1, 0
    %v1942 = vadd.s32 %v1932, %v1936
    %v1943 = vadd.s32 %v1935, %v1941
    %vm1944 = vc.u32 %v1942, %v1938
    %v1945 = vsel %vm1944, 1, 0
    %v1946 = vadd.s32 %v1942, %v1938
    %v1947 = vadd.s32 %v1943, %v1945
    %v1948 = vadd.s32 %v1947, %v1937
    %v1949 = vadd.s32 %v1948, %v1939
    %v1950 = vand.u32 %v1927, 65535
    %v1951 = vshrl.u32 %v1927, 16
    %v1952 = vand.u32 %v1922, 65535
    %v1953 = vshrl.u32 %v1922, 16
    %v1954 = vmul.u32 %v1950, %v1952
    %v1955 = vmul.u32 %v1950, %v1953
    %v1956 = vmul.u32 %v1951, %v1952
    %v1957 = vmul.u32 %v1951, %v1953
    %v1958 = vshll.u32 %v1955, 16
    %v1959 = vshrl.u32 %v1955, 16
    %v1960 = vshll.u32 %v1956, 16
    %v1961 = vshrl.u32 %v1956, 16
    %vm1962 = vc.u32 %v1954, %v1958
    %v1963 = vsel %vm1962, 1, 0
    %v1964 = vadd.s32 %v1954, %v1958
    %v1965 = vadd.s32 %v1957, %v1963
    %vm1966 = vc.u32 %v1964, %v1960
    %v1967 = vsel %vm1966, 1, 0
    %v1968 = vadd.s32 %v1964, %v1960
    %v1969 = vadd.s32 %v1965, %v1967
    %v1970 = vadd.s32 %v1969, %v1959
    %v1971 = vadd.s32 %v1970, %v1961
    %v1972 = vmul.u32 %v1927, %v1918
    %v1973 = vadd.s32 %v1949, %v1968
    %vm1974 = vc.u32 %v1949, %v1968
    %v1975 = vadd.s32 %v1971, 1
    %v1976 = vsel %vm1974, %v1975, %v1971
    %v1977 = vadd.s32 %v1972, %v1976
    %v1978 = vadd.s32 %v1977, 536870912
    %v1979 = vshrl.u32 %v1978, 30
    %v1980 = vshll.u32 %v1979, 30
    %v1981 = vsub.s32 %v1977, %v1980
    %vm1982 = vcmp.lt.s32.totalorder %v1981, 0
    %v1983 = vsub.s32 0, %v1981
    %v1984 = vsel %vm1982, %v1983, %v1981
    %v1985 = vclz %v1984
    %v1986 = vsub.s32 %v1985, 2
    %vm1987 = vcmp.gt.s32.totalorder 0, %v1986
    %v1988 = vsel %vm1987, 0, %v1986
    %v1989 = vsub.s32 32, %v1988
    %v1990 = vshll.u32 %v1981, %v1988
    %v1991 = vshrl.u32 %v1973, %v1989
    %v1992 = vor.u32 %v1990, %v1991
    %v1993 = vsub.s32 4294967266, %v1988
    %v1994 = vadd.s32 %v1993, 127
    %v1995 = vshll.u32 %v1994, 23
    %v1996 = vor.u32 4788187, %v1995
    %v1997 = vand.u32 2147483647, %v1996
    %v1999 = vcvt.s32.f32 %v1992
    %v2000 = vmul.f32 %v1999, %v1997
    %v2001 = vxor.u32 %v2000, 2147483648
    %v2002 = vsel %vm1881, %v2001, %v2000
    %v2003 = vsub.s32 4, %v1979
    %v2004 = vsel %vm1881, %v2003, %v1979
    %v2005 = vsel %vm1880, %v136, %v2002
    %v2006 = vsel %vm1880, 0, %v2004
    %v2007 = vmul.f32 %v2005, %v2005
    %v2008 = vmul.f32 %v2007, -0.001358992
    %v2009 = vadd.f32 %v2008, 0.041655596
    %v2010 = vmul.f32 %v2007, %v2009
    %v2011 = vadd.f32 %v2010, -0.4999988
    %v2012 = vmul.f32 %v2007, %v2011
    %v2013 = vadd.f32 1.0, %v2012
    %v2014 = vmul.f32 %v2005, %v2005
    %v2015 = vmul.f32 %v2014, -0.00019511016
    %v2016 = vadd.f32 %v2015, 0.008332121
    %v2017 = vmul.f32 %v2014, %v2016
    %v2018 = vadd.f32 %v2017, -0.16666654
    %v2019 = vmul.f32 %v2014, %v2018
    %v2020 = vadd.f32 %v2019, 1.0
    %v2021 = vmul.f32 %v2020, %v2005
    %vm2022 = vweird.f32 %v136
    %v2023 = vadd.s32 %v2006, 3
    %v2024 = vand.u32 %v2023, 3
    %vm2025 = vcmp.lt.s32.totalorder %v2024, 2
    %vm2026 = vcmp.eq.s32.totalorder %v2024, 0
    %v2027 = vxor.u32 %v2021, 2147483648
    %v2028 = vsel %vm2026, %v2013, %v2027
    %vm2029 = vcmp.eq.s32.totalorder %v2024, 2
    %v2030 = vxor.u32 %v2013, 2147483648
    %v2031 = vsel %vm2029, %v2030, %v2021
    %v2032 = vsel %vm2025, %v2028, %v2031
    %v2033 = vsel %vm2022, nan, %v2032
    %v2034 = vand.u32 2147483647, %v139
    %vm2035 = vcmp.le.f32.partialorder %v2034, 0.7853982
    %vm2036 = vcmp.lt.s32.totalorder %v139, 0
    %v2037 = vand.u32 %v139, 2139095040
    %v2038 = vshrl.u32 %v2037, 23
    %v2039 = vsub.s32 %v2038, 127
    %v2040 = vand.u32 2147483647, %v139
    %v2041 = vand.u32 %v2040, 8388607
    %v2042 = vor.u32 %v2041, 8388608
    %v2043 = vsub.s32 0, %v2042
    %v2044 = vadd.s32 %v2039, 1
    %vm2045 = vcmp.gt.s32.totalorder %v2044, 0
    %v2046 = vsel %vm2045, %v2044, 0
    %v2047 = vshrl.u32 %v2046, 5
    %v2048 = vand.u32 %v2046, 31
    %v2049 = vsub.s32 32, %v2048
    %v2050 = vshrl.u32 683565275, %v2049
    %v2051 = vshll.u32 683565275, %v2048
    %v2052 = vshrl.u32 2475754826, %v2049
    %v2053 = vor.u32 %v2051, %v2052
    %v2054 = vshll.u32 2475754826, %v2048
    %v2055 = vshrl.u32 2131351028, %v2049
    %v2056 = vor.u32 %v2054, %v2055
    %v2057 = vshll.u32 2131351028, %v2048
    %v2058 = vshrl.u32 2102212464, %v2049
    %v2059 = vor.u32 %v2057, %v2058
    %v2060 = vshll.u32 2102212464, %v2048
    %v2061 = vshrl.u32 920167782, %v2049
    %v2062 = vor.u32 %v2060, %v2061
    %v2063 = vshll.u32 920167782, %v2048
    %v2064 = vshrl.u32 1326507024, %v2049
    %v2065 = vor.u32 %v2063, %v2064
    %vm2066 = vcmp.lt.s32.totalorder %v2047, 1
    %vm2067 = vcmp.lt.s32.totalorder %v2047, 2
    %vm2068 = vcmp.lt.s32.totalorder %v2047, 3
    %vm2069 = vcmp.lt.s32.totalorder %v2047, 4
    %v2070 = vsel %vm2066, %v2050, %v2053
    %v2071 = vsel %vm2069, %v2059, 2102212464
    %v2072 = vsel %vm2068, %v2056, %v2071
    %v2073 = vsel %vm2067, %v2070, %v2072
    %v2074 = vsel %vm2066, %v2053, %v2056
    %v2075 = vsel %vm2069, %v2062, 920167782
    %v2076 = vsel %vm2068, %v2059, %v2075
    %v2077 = vsel %vm2067, %v2074, %v2076
    %v2078 = vsel %vm2066, %v2056, %v2059
    %v2079 = vsel %vm2069, %v2065, 1326507024
    %v2080 = vsel %vm2068, %v2062, %v2079
    %v2081 = vsel %vm2067, %v2078, %v2080
    %v2082 = vshll.u32 %v2042, 8
    %v2083 = vand.u32 %v2082, 65535
    %v2084 = vshrl.u32 %v2082, 16
    %v2085 = vand.u32 %v2081, 65535
    %v2086 = vshrl.u32 %v2081, 16
    %v2087 = vmul.u32 %v2083, %v2085
    %v2088 = vmul.u32 %v2083, %v2086
    %v2089 = vmul.u32 %v2084, %v2085
    %v2090 = vmul.u32 %v2084, %v2086
    %v2091 = vshll.u32 %v2088, 16
    %v2092 = vshrl.u32 %v2088, 16
    %v2093 = vshll.u32 %v2089, 16
    %v2094 = vshrl.u32 %v2089, 16
    %vm2095 = vc.u32 %v2087, %v2091
    %v2096 = vsel %vm2095, 1, 0
    %v2097 = vadd.s32 %v2087, %v2091
    %v2098 = vadd.s32 %v2090, %v2096
    %vm2099 = vc.u32 %v2097, %v2093
    %v2100 = vsel %vm2099, 1, 0
    %v2101 = vadd.s32 %v2097, %v2093
    %v2102 = vadd.s32 %v2098, %v2100
    %v2103 = vadd.s32 %v2102, %v2092
    %v2104 = vadd.s32 %v2103, %v2094
    %v2105 = vand.u32 %v2082, 65535
    %v2106 = vshrl.u32 %v2082, 16
    %v2107 = vand.u32 %v2077, 65535
    %v2108 = vshrl.u32 %v2077, 16
    %v2109 = vmul.u32 %v2105, %v2107
    %v2110 = vmul.u32 %v2105, %v2108
    %v2111 = vmul.u32 %v2106, %v2107
    %v2112 = vmul.u32 %v2106, %v2108
    %v2113 = vshll.u32 %v2110, 16
    %v2114 = vshrl.u32 %v2110, 16
    %v2115 = vshll.u32 %v2111, 16
    %v2116 = vshrl.u32 %v2111, 16
    %vm2117 = vc.u32 %v2109, %v2113
    %v2118 = vsel %vm2117, 1, 0
    %v2119 = vadd.s32 %v2109, %v2113
    %v2120 = vadd.s32 %v2112, %v2118
    %vm2121 = vc.u32 %v2119, %v2115
    %v2122 = vsel %vm2121, 1, 0
    %v2123 = vadd.s32 %v2119, %v2115
    %v2124 = vadd.s32 %v2120, %v2122
    %v2125 = vadd.s32 %v2124, %v2114
    %v2126 = vadd.s32 %v2125, %v2116
    %v2127 = vmul.u32 %v2082, %v2073
    %v2128 = vadd.s32 %v2104, %v2123
    %vm2129 = vc.u32 %v2104, %v2123
    %v2130 = vadd.s32 %v2126, 1
    %v2131 = vsel %vm2129, %v2130, %v2126
    %v2132 = vadd.s32 %v2127, %v2131
    %v2133 = vadd.s32 %v2132, 536870912
    %v2134 = vshrl.u32 %v2133, 30
    %v2135 = vshll.u32 %v2134, 30
    %v2136 = vsub.s32 %v2132, %v2135
    %vm2137 = vcmp.lt.s32.totalorder %v2136, 0
    %v2138 = vsub.s32 0, %v2136
    %v2139 = vsel %vm2137, %v2138, %v2136
    %v2140 = vclz %v2139
    %v2141 = vsub.s32 %v2140, 2
    %vm2142 = vcmp.gt.s32.totalorder 0, %v2141
    %v2143 = vsel %vm2142, 0, %v2141
    %v2144 = vsub.s32 32, %v2143
    %v2145 = vshll.u32 %v2136, %v2143
    %v2146 = vshrl.u32 %v2128, %v2144
    %v2147 = vor.u32 %v2145, %v2146
    %v2148 = vsub.s32 4294967266, %v2143
    %v2149 = vadd.s32 %v2148, 127
    %v2150 = vshll.u32 %v2149, 23
    %v2151 = vor.u32 4788187, %v2150
    %v2152 = vand.u32 2147483647, %v2151
    %v2154 = vcvt.s32.f32 %v2147
    %v2155 = vmul.f32 %v2154, %v2152
    %v2156 = vxor.u32 %v2155, 2147483648
    %v2157 = vsel %vm2036, %v2156, %v2155
    %v2158 = vsub.s32 4, %v2134
    %v2159 = vsel %vm2036, %v2158, %v2134
    %v2160 = vsel %vm2035, %v139, %v2157
    %v2161 = vsel %vm2035, 0, %v2159
    %v2162 = vmul.f32 %v2160, %v2160
    %v2163 = vmul.f32 %v2162, -0.001358992
    %v2164 = vadd.f32 %v2163, 0.041655596
    %v2165 = vmul.f32 %v2162, %v2164
    %v2166 = vadd.f32 %v2165, -0.4999988
    %v2167 = vmul.f32 %v2162, %v2166
    %v2168 = vadd.f32 1.0, %v2167
    %v2169 = vmul.f32 %v2160, %v2160
    %v2170 = vmul.f32 %v2169, -0.00019511016
    %v2171 = vadd.f32 %v2170, 0.008332121
    %v2172 = vmul.f32 %v2169, %v2171
    %v2173 = vadd.f32 %v2172, -0.16666654
    %v2174 = vmul.f32 %v2169, %v2173
    %v2175 = vadd.f32 %v2174, 1.0
    %v2176 = vmul.f32 %v2175, %v2160
    %vm2177 = vweird.f32 %v139
    %v2178 = vadd.s32 %v2161, 3
    %v2179 = vand.u32 %v2178, 3
    %vm2180 = vcmp.lt.s32.totalorder %v2179, 2
    %vm2181 = vcmp.eq.s32.totalorder %v2179, 0
    %v2182 = vxor.u32 %v2176, 2147483648
    %v2183 = vsel %vm2181, %v2168, %v2182
    %vm2184 = vcmp.eq.s32.totalorder %v2179, 2
    %v2185 = vxor.u32 %v2168, 2147483648
    %v2186 = vsel %vm2184, %v2185, %v2176
    %v2187 = vsel %vm2180, %v2183, %v2186
    %v2188 = vsel %vm2177, nan, %v2187
    %v2189 = vand.u32 2147483647, %v142
    %vm2190 = vcmp.le.f32.partialorder %v2189, 0.7853982
    %vm2191 = vcmp.lt.s32.totalorder %v142, 0
    %v2192 = vand.u32 %v142, 2139095040
    %v2193 = vshrl.u32 %v2192, 23
    %v2194 = vsub.s32 %v2193, 127
    %v2195 = vand.u32 2147483647, %v142
    %v2196 = vand.u32 %v2195, 8388607
    %v2197 = vor.u32 %v2196, 8388608
    %v2198 = vsub.s32 0, %v2197
    %v2199 = vadd.s32 %v2194, 1
    %vm2200 = vcmp.gt.s32.totalorder %v2199, 0
    %v2201 = vsel %vm2200, %v2199, 0
    %v2202 = vshrl.u32 %v2201, 5
    %v2203 = vand.u32 %v2201, 31
    %v2204 = vsub.s32 32, %v2203
    %v2205 = vshrl.u32 683565275, %v2204
    %v2206 = vshll.u32 683565275, %v2203
    %v2207 = vshrl.u32 2475754826, %v2204
    %v2208 = vor.u32 %v2206, %v2207
    %v2209 = vshll.u32 2475754826, %v2203
    %v2210 = vshrl.u32 2131351028, %v2204
    %v2211 = vor.u32 %v2209, %v2210
    %v2212 = vshll.u32 2131351028, %v2203
    %v2213 = vshrl.u32 2102212464, %v2204
    %v2214 = vor.u32 %v2212, %v2213
    %v2215 = vshll.u32 2102212464, %v2203
    %v2216 = vshrl.u32 920167782, %v2204
    %v2217 = vor.u32 %v2215, %v2216
    %v2218 = vshll.u32 920167782, %v2203
    %v2219 = vshrl.u32 1326507024, %v2204
    %v2220 = vor.u32 %v2218, %v2219
    %vm2221 = vcmp.lt.s32.totalorder %v2202, 1
    %vm2222 = vcmp.lt.s32.totalorder %v2202, 2
    %vm2223 = vcmp.lt.s32.totalorder %v2202, 3
    %vm2224 = vcmp.lt.s32.totalorder %v2202, 4
    %v2225 = vsel %vm2221, %v2205, %v2208
    %v2226 = vsel %vm2224, %v2214, 2102212464
    %v2227 = vsel %vm2223, %v2211, %v2226
    %v2228 = vsel %vm2222, %v2225, %v2227
    %v2229 = vsel %vm2221, %v2208, %v2211
    %v2230 = vsel %vm2224, %v2217, 920167782
    %v2231 = vsel %vm2223, %v2214, %v2230
    %v2232 = vsel %vm2222, %v2229, %v2231
    %v2233 = vsel %vm2221, %v2211, %v2214
    %v2234 = vsel %vm2224, %v2220, 1326507024
    %v2235 = vsel %vm2223, %v2217, %v2234
    %v2236 = vsel %vm2222, %v2233, %v2235
    %v2237 = vshll.u32 %v2197, 8
    %v2238 = vand.u32 %v2237, 65535
    %v2239 = vshrl.u32 %v2237, 16
    %v2240 = vand.u32 %v2236, 65535
    %v2241 = vshrl.u32 %v2236, 16
    %v2242 = vmul.u32 %v2238, %v2240
    %v2243 = vmul.u32 %v2238, %v2241
    %v2244 = vmul.u32 %v2239, %v2240
    %v2245 = vmul.u32 %v2239, %v2241
    %v2246 = vshll.u32 %v2243, 16
    %v2247 = vshrl.u32 %v2243, 16
    %v2248 = vshll.u32 %v2244, 16
    %v2249 = vshrl.u32 %v2244, 16
    %vm2250 = vc.u32 %v2242, %v2246
    %v2251 = vsel %vm2250, 1, 0
    %v2252 = vadd.s32 %v2242, %v2246
    %v2253 = vadd.s32 %v2245, %v2251
    %vm2254 = vc.u32 %v2252, %v2248
    %v2255 = vsel %vm2254, 1, 0
    %v2256 = vadd.s32 %v2252, %v2248
    %v2257 = vadd.s32 %v2253, %v2255
    %v2258 = vadd.s32 %v2257, %v2247
    %v2259 = vadd.s32 %v2258, %v2249
    %v2260 = vand.u32 %v2237, 65535
    %v2261 = vshrl.u32 %v2237, 16
    %v2262 = vand.u32 %v2232, 65535
    %v2263 = vshrl.u32 %v2232, 16
    %v2264 = vmul.u32 %v2260, %v2262
    %v2265 = vmul.u32 %v2260, %v2263
    %v2266 = vmul.u32 %v2261, %v2262
    %v2267 = vmul.u32 %v2261, %v2263
    %v2268 = vshll.u32 %v2265, 16
    %v2269 = vshrl.u32 %v2265, 16
    %v2270 = vshll.u32 %v2266, 16
    %v2271 = vshrl.u32 %v2266, 16
    %vm2272 = vc.u32 %v2264, %v2268
    %v2273 = vsel %vm2272, 1, 0
    %v2274 = vadd.s32 %v2264, %v2268
    %v2275 = vadd.s32 %v2267, %v2273
    %vm2276 = vc.u32 %v2274, %v2270
    %v2277 = vsel %vm2276, 1, 0
    %v2278 = vadd.s32 %v2274, %v2270
    %v2279 = vadd.s32 %v2275, %v2277
    %v2280 = vadd.s32 %v2279, %v2269
    %v2281 = vadd.s32 %v2280, %v2271
    %v2282 = vmul.u32 %v2237, %v2228
    %v2283 = vadd.s32 %v2259, %v2278
    %vm2284 = vc.u32 %v2259, %v2278
    %v2285 = vadd.s32 %v2281, 1
    %v2286 = vsel %vm2284, %v2285, %v2281
    %v2287 = vadd.s32 %v2282, %v2286
    %v2288 = vadd.s32 %v2287, 536870912
    %v2289 = vshrl.u32 %v2288, 30
    %v2290 = vshll.u32 %v2289, 30
    %v2291 = vsub.s32 %v2287, %v2290
    %vm2292 = vcmp.lt.s32.totalorder %v2291, 0
    %v2293 = vsub.s32 0, %v2291
    %v2294 = vsel %vm2292, %v2293, %v2291
    %v2295 = vclz %v2294
    %v2296 = vsub.s32 %v2295, 2
    %vm2297 = vcmp.gt.s32.totalorder 0, %v2296
    %v2298 = vsel %vm2297, 0, %v2296
    %v2299 = vsub.s32 32, %v2298
    %v2300 = vshll.u32 %v2291, %v2298
    %v2301 = vshrl.u32 %v2283, %v2299
    %v2302 = vor.u32 %v2300, %v2301
    %v2303 = vsub.s32 4294967266, %v2298
    %v2304 = vadd.s32 %v2303, 127
    %v2305 = vshll.u32 %v2304, 23
    %v2306 = vor.u32 4788187, %v2305
    %v2307 = vand.u32 2147483647, %v2306
    %v2309 = vcvt.s32.f32 %v2302
    %v2310 = vmul.f32 %v2309, %v2307
    %v2311 = vxor.u32 %v2310, 2147483648
    %v2312 = vsel %vm2191, %v2311, %v2310
    %v2313 = vsub.s32 4, %v2289
    %v2314 = vsel %vm2191, %v2313, %v2289
    %v2315 = vsel %vm2190, %v142, %v2312
    %v2316 = vsel %vm2190, 0, %v2314
    %v2317 = vmul.f32 %v2315, %v2315
    %v2318 = vmul.f32 %v2317, -0.001358992
    %v2319 = vadd.f32 %v2318, 0.041655596
    %v2320 = vmul.f32 %v2317, %v2319
    %v2321 = vadd.f32 %v2320, -0.4999988
    %v2322 = vmul.f32 %v2317, %v2321
    %v2323 = vadd.f32 1.0, %v2322
    %v2324 = vmul.f32 %v2315, %v2315
    %v2325 = vmul.f32 %v2324, -0.00019511016
    %v2326 = vadd.f32 %v2325, 0.008332121
    %v2327 = vmul.f32 %v2324, %v2326
    %v2328 = vadd.f32 %v2327, -0.16666654
    %v2329 = vmul.f32 %v2324, %v2328
    %v2330 = vadd.f32 %v2329, 1.0
    %v2331 = vmul.f32 %v2330, %v2315
    %vm2332 = vweird.f32 %v142
    %v2333 = vadd.s32 %v2316, 3
    %v2334 = vand.u32 %v2333, 3
    %vm2335 = vcmp.lt.s32.totalorder %v2334, 2
    %vm2336 = vcmp.eq.s32.totalorder %v2334, 0
    %v2337 = vxor.u32 %v2331, 2147483648
    %v2338 = vsel %vm2336, %v2323, %v2337
    %vm2339 = vcmp.eq.s32.totalorder %v2334, 2
    %v2340 = vxor.u32 %v2323, 2147483648
    %v2341 = vsel %vm2339, %v2340, %v2331
    %v2342 = vsel %vm2335, %v2338, %v2341
    %v2343 = vsel %vm2332, nan, %v2342
    %v2344 = vand.u32 2147483647, %v145
    %vm2345 = vcmp.le.f32.partialorder %v2344, 0.7853982
    %vm2346 = vcmp.lt.s32.totalorder %v145, 0
    %v2347 = vand.u32 %v145, 2139095040
    %v2348 = vshrl.u32 %v2347, 23
    %v2349 = vsub.s32 %v2348, 127
    %v2350 = vand.u32 2147483647, %v145
    %v2351 = vand.u32 %v2350, 8388607
    %v2352 = vor.u32 %v2351, 8388608
    %v2353 = vsub.s32 0, %v2352
    %v2354 = vadd.s32 %v2349, 1
    %vm2355 = vcmp.gt.s32.totalorder %v2354, 0
    %v2356 = vsel %vm2355, %v2354, 0
    %v2357 = vshrl.u32 %v2356, 5
    %v2358 = vand.u32 %v2356, 31
    %v2359 = vsub.s32 32, %v2358
    %v2360 = vshrl.u32 683565275, %v2359
    %v2361 = vshll.u32 683565275, %v2358
    %v2362 = vshrl.u32 2475754826, %v2359
    %v2363 = vor.u32 %v2361, %v2362
    %v2364 = vshll.u32 2475754826, %v2358
    %v2365 = vshrl.u32 2131351028, %v2359
    %v2366 = vor.u32 %v2364, %v2365
    %v2367 = vshll.u32 2131351028, %v2358
    %v2368 = vshrl.u32 2102212464, %v2359
    %v2369 = vor.u32 %v2367, %v2368
    %v2370 = vshll.u32 2102212464, %v2358
    %v2371 = vshrl.u32 920167782, %v2359
    %v2372 = vor.u32 %v2370, %v2371
    %v2373 = vshll.u32 920167782, %v2358
    %v2374 = vshrl.u32 1326507024, %v2359
    %v2375 = vor.u32 %v2373, %v2374
    %vm2376 = vcmp.lt.s32.totalorder %v2357, 1
    %vm2377 = vcmp.lt.s32.totalorder %v2357, 2
    %vm2378 = vcmp.lt.s32.totalorder %v2357, 3
    %vm2379 = vcmp.lt.s32.totalorder %v2357, 4
    %v2380 = vsel %vm2376, %v2360, %v2363
    %v2381 = vsel %vm2379, %v2369, 2102212464
    %v2382 = vsel %vm2378, %v2366, %v2381
    %v2383 = vsel %vm2377, %v2380, %v2382
    %v2384 = vsel %vm2376, %v2363, %v2366
    %v2385 = vsel %vm2379, %v2372, 920167782
    %v2386 = vsel %vm2378, %v2369, %v2385
    %v2387 = vsel %vm2377, %v2384, %v2386
    %v2388 = vsel %vm2376, %v2366, %v2369
    %v2389 = vsel %vm2379, %v2375, 1326507024
    %v2390 = vsel %vm2378, %v2372, %v2389
    %v2391 = vsel %vm2377, %v2388, %v2390
    %v2392 = vshll.u32 %v2352, 8
    %v2393 = vand.u32 %v2392, 65535
    %v2394 = vshrl.u32 %v2392, 16
    %v2395 = vand.u32 %v2391, 65535
    %v2396 = vshrl.u32 %v2391, 16
    %v2397 = vmul.u32 %v2393, %v2395
    %v2398 = vmul.u32 %v2393, %v2396
    %v2399 = vmul.u32 %v2394, %v2395
    %v2400 = vmul.u32 %v2394, %v2396
    %v2401 = vshll.u32 %v2398, 16
    %v2402 = vshrl.u32 %v2398, 16
    %v2403 = vshll.u32 %v2399, 16
    %v2404 = vshrl.u32 %v2399, 16
    %vm2405 = vc.u32 %v2397, %v2401
    %v2406 = vsel %vm2405, 1, 0
    %v2407 = vadd.s32 %v2397, %v2401
    %v2408 = vadd.s32 %v2400, %v2406
    %vm2409 = vc.u32 %v2407, %v2403
    %v2410 = vsel %vm2409, 1, 0
    %v2411 = vadd.s32 %v2407, %v2403
    %v2412 = vadd.s32 %v2408, %v2410
    %v2413 = vadd.s32 %v2412, %v2402
    %v2414 = vadd.s32 %v2413, %v2404
    %v2415 = vand.u32 %v2392, 65535
    %v2416 = vshrl.u32 %v2392, 16
    %v2417 = vand.u32 %v2387, 65535
    %v2418 = vshrl.u32 %v2387, 16
    %v2419 = vmul.u32 %v2415, %v2417
    %v2420 = vmul.u32 %v2415, %v2418
    %v2421 = vmul.u32 %v2416, %v2417
    %v2422 = vmul.u32 %v2416, %v2418
    %v2423 = vshll.u32 %v2420, 16
    %v2424 = vshrl.u32 %v2420, 16
    %v2425 = vshll.u32 %v2421, 16
    %v2426 = vshrl.u32 %v2421, 16
    %vm2427 = vc.u32 %v2419, %v2423
    %v2428 = vsel %vm2427, 1, 0
    %v2429 = vadd.s32 %v2419, %v2423
    %v2430 = vadd.s32 %v2422, %v2428
    %vm2431 = vc.u32 %v2429, %v2425
    %v2432 = vsel %vm2431, 1, 0
    %v2433 = vadd.s32 %v2429, %v2425
    %v2434 = vadd.s32 %v2430, %v2432
    %v2435 = vadd.s32 %v2434, %v2424
    %v2436 = vadd.s32 %v2435, %v2426
    %v2437 = vmul.u32 %v2392, %v2383
    %v2438 = vadd.s32 %v2414, %v2433
    %vm2439 = vc.u32 %v2414, %v2433
    %v2440 = vadd.s32 %v2436, 1
    %v2441 = vsel %vm2439, %v2440, %v2436
    %v2442 = vadd.s32 %v2437, %v2441
    %v2443 = vadd.s32 %v2442, 536870912
    %v2444 = vshrl.u32 %v2443, 30
    %v2445 = vshll.u32 %v2444, 30
    %v2446 = vsub.s32 %v2442, %v2445
    %vm2447 = vcmp.lt.s32.totalorder %v2446, 0
    %v2448 = vsub.s32 0, %v2446
    %v2449 = vsel %vm2447, %v2448, %v2446
    %v2450 = vclz %v2449
    %v2451 = vsub.s32 %v2450, 2
    %vm2452 = vcmp.gt.s32.totalorder 0, %v2451
    %v2453 = vsel %vm2452, 0, %v2451
    %v2454 = vsub.s32 32, %v2453
    %v2455 = vshll.u32 %v2446, %v2453
    %v2456 = vshrl.u32 %v2438, %v2454
    %v2457 = vor.u32 %v2455, %v2456
    %v2458 = vsub.s32 4294967266, %v2453
    %v2459 = vadd.s32 %v2458, 127
    %v2460 = vshll.u32 %v2459, 23
    %v2461 = vor.u32 4788187, %v2460
    %v2462 = vand.u32 2147483647, %v2461
    %v2464 = vcvt.s32.f32 %v2457
    %v2465 = vmul.f32 %v2464, %v2462
    %v2466 = vxor.u32 %v2465, 2147483648
    %v2467 = vsel %vm2346, %v2466, %v2465
    %v2468 = vsub.s32 4, %v2444
    %v2469 = vsel %vm2346, %v2468, %v2444
    %v2470 = vsel %vm2345, %v145, %v2467
    %v2471 = vsel %vm2345, 0, %v2469
    %v2472 = vmul.f32 %v2470, %v2470
    %v2473 = vmul.f32 %v2472, -0.001358992
    %v2474 = vadd.f32 %v2473, 0.041655596
    %v2475 = vmul.f32 %v2472, %v2474
    %v2476 = vadd.f32 %v2475, -0.4999988
    %v2477 = vmul.f32 %v2472, %v2476
    %v2478 = vadd.f32 1.0, %v2477
    %v2479 = vmul.f32 %v2470, %v2470
    %v2480 = vmul.f32 %v2479, -0.00019511016
    %v2481 = vadd.f32 %v2480, 0.008332121
    %v2482 = vmul.f32 %v2479, %v2481
    %v2483 = vadd.f32 %v2482, -0.16666654
    %v2484 = vmul.f32 %v2479, %v2483
    %v2485 = vadd.f32 %v2484, 1.0
    %v2486 = vmul.f32 %v2485, %v2470
    %vm2487 = vweird.f32 %v145
    %v2488 = vadd.s32 %v2471, 3
    %v2489 = vand.u32 %v2488, 3
    %vm2490 = vcmp.lt.s32.totalorder %v2489, 2
    %vm2491 = vcmp.eq.s32.totalorder %v2489, 0
    %v2492 = vxor.u32 %v2486, 2147483648
    %v2493 = vsel %vm2491, %v2478, %v2492
    %vm2494 = vcmp.eq.s32.totalorder %v2489, 2
    %v2495 = vxor.u32 %v2478, 2147483648
    %v2496 = vsel %vm2494, %v2495, %v2486
    %v2497 = vsel %vm2490, %v2493, %v2496
    %v2498 = vsel %vm2487, nan, %v2497
    %v2499 = vand.u32 2147483647, %v148
    %vm2500 = vcmp.le.f32.partialorder %v2499, 0.7853982
    %vm2501 = vcmp.lt.s32.totalorder %v148, 0
    %v2502 = vand.u32 %v148, 2139095040
    %v2503 = vshrl.u32 %v2502, 23
    %v2504 = vsub.s32 %v2503, 127
    %v2505 = vand.u32 2147483647, %v148
    %v2506 = vand.u32 %v2505, 8388607
    %v2507 = vor.u32 %v2506, 8388608
    %v2508 = vsub.s32 0, %v2507
    %v2509 = vadd.s32 %v2504, 1
    %vm2510 = vcmp.gt.s32.totalorder %v2509, 0
    %v2511 = vsel %vm2510, %v2509, 0
    %v2512 = vshrl.u32 %v2511, 5
    %v2513 = vand.u32 %v2511, 31
    %v2514 = vsub.s32 32, %v2513
    %v2515 = vshrl.u32 683565275, %v2514
    %v2516 = vshll.u32 683565275, %v2513
    %v2517 = vshrl.u32 2475754826, %v2514
    %v2518 = vor.u32 %v2516, %v2517
    %v2519 = vshll.u32 2475754826, %v2513
    %v2520 = vshrl.u32 2131351028, %v2514
    %v2521 = vor.u32 %v2519, %v2520
    %v2522 = vshll.u32 2131351028, %v2513
    %v2523 = vshrl.u32 2102212464, %v2514
    %v2524 = vor.u32 %v2522, %v2523
    %v2525 = vshll.u32 2102212464, %v2513
    %v2526 = vshrl.u32 920167782, %v2514
    %v2527 = vor.u32 %v2525, %v2526
    %v2528 = vshll.u32 920167782, %v2513
    %v2529 = vshrl.u32 1326507024, %v2514
    %v2530 = vor.u32 %v2528, %v2529
    %vm2531 = vcmp.lt.s32.totalorder %v2512, 1
    %vm2532 = vcmp.lt.s32.totalorder %v2512, 2
    %vm2533 = vcmp.lt.s32.totalorder %v2512, 3
    %vm2534 = vcmp.lt.s32.totalorder %v2512, 4
    %v2535 = vsel %vm2531, %v2515, %v2518
    %v2536 = vsel %vm2534, %v2524, 2102212464
    %v2537 = vsel %vm2533, %v2521, %v2536
    %v2538 = vsel %vm2532, %v2535, %v2537
    %v2539 = vsel %vm2531, %v2518, %v2521
    %v2540 = vsel %vm2534, %v2527, 920167782
    %v2541 = vsel %vm2533, %v2524, %v2540
    %v2542 = vsel %vm2532, %v2539, %v2541
    %v2543 = vsel %vm2531, %v2521, %v2524
    %v2544 = vsel %vm2534, %v2530, 1326507024
    %v2545 = vsel %vm2533, %v2527, %v2544
    %v2546 = vsel %vm2532, %v2543, %v2545
    %v2547 = vshll.u32 %v2507, 8
    %v2548 = vand.u32 %v2547, 65535
    %v2549 = vshrl.u32 %v2547, 16
    %v2550 = vand.u32 %v2546, 65535
    %v2551 = vshrl.u32 %v2546, 16
    %v2552 = vmul.u32 %v2548, %v2550
    %v2553 = vmul.u32 %v2548, %v2551
    %v2554 = vmul.u32 %v2549, %v2550
    %v2555 = vmul.u32 %v2549, %v2551
    %v2556 = vshll.u32 %v2553, 16
    %v2557 = vshrl.u32 %v2553, 16
    %v2558 = vshll.u32 %v2554, 16
    %v2559 = vshrl.u32 %v2554, 16
    %vm2560 = vc.u32 %v2552, %v2556
    %v2561 = vsel %vm2560, 1, 0
    %v2562 = vadd.s32 %v2552, %v2556
    %v2563 = vadd.s32 %v2555, %v2561
    %vm2564 = vc.u32 %v2562, %v2558
    %v2565 = vsel %vm2564, 1, 0
    %v2566 = vadd.s32 %v2562, %v2558
    %v2567 = vadd.s32 %v2563, %v2565
    %v2568 = vadd.s32 %v2567, %v2557
    %v2569 = vadd.s32 %v2568, %v2559
    %v2570 = vand.u32 %v2547, 65535
    %v2571 = vshrl.u32 %v2547, 16
    %v2572 = vand.u32 %v2542, 65535
    %v2573 = vshrl.u32 %v2542, 16
    %v2574 = vmul.u32 %v2570, %v2572
    %v2575 = vmul.u32 %v2570, %v2573
    %v2576 = vmul.u32 %v2571, %v2572
    %v2577 = vmul.u32 %v2571, %v2573
    %v2578 = vshll.u32 %v2575, 16
    %v2579 = vshrl.u32 %v2575, 16
    %v2580 = vshll.u32 %v2576, 16
    %v2581 = vshrl.u32 %v2576, 16
    %vm2582 = vc.u32 %v2574, %v2578
    %v2583 = vsel %vm2582, 1, 0
    %v2584 = vadd.s32 %v2574, %v2578
    %v2585 = vadd.s32 %v2577, %v2583
    %vm2586 = vc.u32 %v2584, %v2580
    %v2587 = vsel %vm2586, 1, 0
    %v2588 = vadd.s32 %v2584, %v2580
    %v2589 = vadd.s32 %v2585, %v2587
    %v2590 = vadd.s32 %v2589, %v2579
    %v2591 = vadd.s32 %v2590, %v2581
    %v2592 = vmul.u32 %v2547, %v2538
    %v2593 = vadd.s32 %v2569, %v2588
    %vm2594 = vc.u32 %v2569, %v2588
    %v2595 = vadd.s32 %v2591, 1
    %v2596 = vsel %vm2594, %v2595, %v2591
    %v2597 = vadd.s32 %v2592, %v2596
    %v2598 = vadd.s32 %v2597, 536870912
    %v2599 = vshrl.u32 %v2598, 30
    %v2600 = vshll.u32 %v2599, 30
    %v2601 = vsub.s32 %v2597, %v2600
    %vm2602 = vcmp.lt.s32.totalorder %v2601, 0
    %v2603 = vsub.s32 0, %v2601
    %v2604 = vsel %vm2602, %v2603, %v2601
    %v2605 = vclz %v2604
    %v2606 = vsub.s32 %v2605, 2
    %vm2607 = vcmp.gt.s32.totalorder 0, %v2606
    %v2608 = vsel %vm2607, 0, %v2606
    %v2609 = vsub.s32 32, %v2608
    %v2610 = vshll.u32 %v2601, %v2608
    %v2611 = vshrl.u32 %v2593, %v2609
    %v2612 = vor.u32 %v2610, %v2611
    %v2613 = vsub.s32 4294967266, %v2608
    %v2614 = vadd.s32 %v2613, 127
    %v2615 = vshll.u32 %v2614, 23
    %v2616 = vor.u32 4788187, %v2615
    %v2617 = vand.u32 2147483647, %v2616
    %v2619 = vcvt.s32.f32 %v2612
    %v2620 = vmul.f32 %v2619, %v2617
    %v2621 = vxor.u32 %v2620, 2147483648
    %v2622 = vsel %vm2501, %v2621, %v2620
    %v2623 = vsub.s32 4, %v2599
    %v2624 = vsel %vm2501, %v2623, %v2599
    %v2625 = vsel %vm2500, %v148, %v2622
    %v2626 = vsel %vm2500, 0, %v2624
    %v2627 = vmul.f32 %v2625, %v2625
    %v2628 = vmul.f32 %v2627, -0.001358992
    %v2629 = vadd.f32 %v2628, 0.041655596
    %v2630 = vmul.f32 %v2627, %v2629
    %v2631 = vadd.f32 %v2630, -0.4999988
    %v2632 = vmul.f32 %v2627, %v2631
    %v2633 = vadd.f32 1.0, %v2632
    %v2634 = vmul.f32 %v2625, %v2625
    %v2635 = vmul.f32 %v2634, -0.00019511016
    %v2636 = vadd.f32 %v2635, 0.008332121
    %v2637 = vmul.f32 %v2634, %v2636
    %v2638 = vadd.f32 %v2637, -0.16666654
    %v2639 = vmul.f32 %v2634, %v2638
    %v2640 = vadd.f32 %v2639, 1.0
    %v2641 = vmul.f32 %v2640, %v2625
    %vm2642 = vweird.f32 %v148
    %v2643 = vadd.s32 %v2626, 3
    %v2644 = vand.u32 %v2643, 3
    %vm2645 = vcmp.lt.s32.totalorder %v2644, 2
    %vm2646 = vcmp.eq.s32.totalorder %v2644, 0
    %v2647 = vxor.u32 %v2641, 2147483648
    %v2648 = vsel %vm2646, %v2633, %v2647
    %vm2649 = vcmp.eq.s32.totalorder %v2644, 2
    %v2650 = vxor.u32 %v2633, 2147483648
    %v2651 = vsel %vm2649, %v2650, %v2641
    %v2652 = vsel %vm2645, %v2648, %v2651
    %v2653 = vsel %vm2642, nan, %v2652
    %v2654 = vmul.f32 %v166, %v1568
    %v2655 = vmul.f32 %v167, %v1723
    %v2656 = vmul.f32 %v168, %v1878
    %v2657 = vmul.f32 %v169, %v2033
    %v2658 = vmul.f32 %v170, %v2188
    %v2659 = vmul.f32 %v171, %v2343
    %v2660 = vmul.f32 %v172, %v2498
    %v2661 = vmul.f32 %v173, %v2653
    %v2662 = vpack.c.bf16 %v1407, %v1406
    %v2663 = vpack.c.bf16 %v2655, %v2654
    %v2664 = vpack.c.bf16 %v1409, %v1408
    %v2665 = vpack.c.bf16 %v2657, %v2656
    %v2666 = vpack.c.bf16 %v1411, %v1410
    %v2667 = vpack.c.bf16 %v2659, %v2658
    %v2668 = vpack.c.bf16 %v1413, %v1412
    %v2669 = vpack.c.bf16 %v2661, %v2660
    %v2670 = vld [vmem:[%s3] sm:$0xf]
    %v2671 = vld [vmem:[%s3 + $0x4] sm:$0xf]
    %v2672 = vld [vmem:[%s3 + $0x8] sm:$0xf]
    %v2673 = vld [vmem:[%s3 + $0xc] sm:$0xf]
    %v2674 = vld [vmem:[%s3 + $0x10] sm:$0xf]
    %v2675 = vld [vmem:[%s3 + $0x14] sm:$0xf]
    %v2676 = vld [vmem:[%s3 + $0x18] sm:$0xf]
    %v2677 = vld [vmem:[%s3 + $0x1c] sm:$0xf]
    %v2678 = vld [vmem:[%s3 + $0x20] sm:$0xf]
    %v2679 = vld [vmem:[%s3 + $0x24] sm:$0xf]
    %v2680 = vld [vmem:[%s3 + $0x28] sm:$0xf]
    %v2681 = vld [vmem:[%s3 + $0x2c] sm:$0xf]
    %v2682 = vld [vmem:[%s3 + $0x30] sm:$0xf]
    %v2683 = vld [vmem:[%s3 + $0x34] sm:$0xf]
    %v2684 = vld [vmem:[%s3 + $0x38] sm:$0xf]
    %v2685 = vld [vmem:[%s3 + $0x3c] sm:$0xf]
    %v2686 = vld [vmem:[%s3 + $0x40] sm:$0xf]
    %v2687 = vld [vmem:[%s3 + $0x44] sm:$0xf]
    %v2688 = vld [vmem:[%s3 + $0x48] sm:$0xf]
    %v2689 = vld [vmem:[%s3 + $0x4c] sm:$0xf]
    %v2690 = vld [vmem:[%s3 + $0x50] sm:$0xf]
    %v2691 = vld [vmem:[%s3 + $0x54] sm:$0xf]
    %v2692 = vld [vmem:[%s3 + $0x58] sm:$0xf]
    %v2693 = vld [vmem:[%s3 + $0x5c] sm:$0xf]
    %v2694 = vld [vmem:[%s3 + $0x60] sm:$0xf]
    %v2695 = vld [vmem:[%s3 + $0x64] sm:$0xf]
    %v2696 = vld [vmem:[%s3 + $0x68] sm:$0xf]
    %v2697 = vld [vmem:[%s3 + $0x6c] sm:$0xf]
    %v2698 = vld [vmem:[%s3 + $0x70] sm:$0xf]
    %v2699 = vld [vmem:[%s3 + $0x74] sm:$0xf]
    %v2700 = vld [vmem:[%s3 + $0x78] sm:$0xf]
    %v2701 = vld [vmem:[%s3 + $0x7c] sm:$0xf]
    %v2734 = vunpack.c.l.b16 %v2670
    %v2735 = vunpack.c.l.b16 %v2671
    %v2736 = vunpack.c.l.b16 %v2672
    %v2737 = vunpack.c.l.b16 %v2673
    %v2738 = vunpack.c.l.b16 %v2674
    %v2739 = vunpack.c.l.b16 %v2675
    %v2740 = vunpack.c.l.b16 %v2676
    %v2741 = vunpack.c.l.b16 %v2677
    %v2742 = vunpack.c.l.b16 %v2678
    %v2743 = vunpack.c.l.b16 %v2679
    %v2744 = vunpack.c.l.b16 %v2680
    %v2745 = vunpack.c.l.b16 %v2681
    %v2746 = vunpack.c.l.b16 %v2682
    %v2747 = vunpack.c.l.b16 %v2683
    %v2748 = vunpack.c.l.b16 %v2684
    %v2749 = vunpack.c.l.b16 %v2685
    %v2750 = vunpack.c.l.b16 %v2686
    %v2751 = vunpack.c.l.b16 %v2687
    %v2752 = vunpack.c.l.b16 %v2688
    %v2753 = vunpack.c.l.b16 %v2689
    %v2754 = vunpack.c.l.b16 %v2690
    %v2755 = vunpack.c.l.b16 %v2691
    %v2756 = vunpack.c.l.b16 %v2692
    %v2757 = vunpack.c.l.b16 %v2693
    %v2758 = vunpack.c.l.b16 %v2694
    %v2759 = vunpack.c.l.b16 %v2695
    %v2760 = vunpack.c.l.b16 %v2696
    %v2761 = vunpack.c.l.b16 %v2697
    %v2762 = vunpack.c.l.b16 %v2698
    %v2763 = vunpack.c.l.b16 %v2699
    %v2764 = vunpack.c.l.b16 %v2700
    %v2765 = vunpack.c.l.b16 %v2701
    %v2766 = vpack.c.b16 %v2735, %v2734
    %v2767 = vpack.c.b16 %v2737, %v2736
    %v2768 = vpack.c.b16 %v2739, %v2738
    %v2769 = vpack.c.b16 %v2741, %v2740
    %v2770 = vpack.c.b16 %v2743, %v2742
    %v2771 = vpack.c.b16 %v2745, %v2744
    %v2772 = vpack.c.b16 %v2747, %v2746
    %v2773 = vpack.c.b16 %v2749, %v2748
    %v2774 = vpack.c.b16 %v2751, %v2750
    %v2775 = vpack.c.b16 %v2753, %v2752
    %v2776 = vpack.c.b16 %v2755, %v2754
    %v2777 = vpack.c.b16 %v2757, %v2756
    %v2778 = vpack.c.b16 %v2759, %v2758
    %v2779 = vpack.c.b16 %v2761, %v2760
    %v2780 = vpack.c.b16 %v2763, %v2762
    %v2781 = vpack.c.b16 %v2765, %v2764
    %2798 = vmatpush.bf16.msra.mxu0 %v2773
    %2799 = vmatpush.bf16.msra.mxu0 %v2772
    %2800 = vmatpush.bf16.msra.mxu0 %v2771
    %2801 = vmatpush.bf16.msra.mxu0 %v2770
    %2802 = vmatpush.bf16.msra.mxu0 %v2769
    %2803 = vmatpush.bf16.msra.mxu0 %v2768
    %2804 = vmatpush.bf16.msra.mxu0 %v2767
    %2805 = vmatpush.bf16.msra.mxu0 %v2766
    %2806 = vmatmul.bf16.gmra.mxu0 %v2662
    %v2807 = vpop.f32.mrf.mxu0
    %v2808 = vadd.f32 0.0, %v2807
    %v2809 = vpop.f32.mrf.mxu0
    %v2810 = vadd.f32 0.0, %v2809
    %2811 = vmatmul.bf16.gmra.mxu0 %v2664
    %v2812 = vpop.f32.mrf.mxu0
    %v2813 = vadd.f32 0.0, %v2812
    %v2814 = vpop.f32.mrf.mxu0
    %v2815 = vadd.f32 0.0, %v2814
    %2816 = vmatmul.bf16.gmra.mxu0 %v2666
    %v2817 = vpop.f32.mrf.mxu0
    %v2818 = vadd.f32 0.0, %v2817
    %v2819 = vpop.f32.mrf.mxu0
    %v2820 = vadd.f32 0.0, %v2819
    %2821 = vmatmul.bf16.gmra.mxu0 %v2668
    %v2822 = vpop.f32.mrf.mxu0
    %v2823 = vadd.f32 0.0, %v2822
    %v2824 = vpop.f32.mrf.mxu0
    %v2825 = vadd.f32 0.0, %v2824
    %2826 = vdwg.mxu0
    %2827 = vmatpush.bf16.msra.mxu0 %v2781
    %2828 = vmatpush.bf16.msra.mxu0 %v2780
    %2829 = vmatpush.bf16.msra.mxu0 %v2779
    %2830 = vmatpush.bf16.msra.mxu0 %v2778
    %2831 = vmatpush.bf16.msra.mxu0 %v2777
    %2832 = vmatpush.bf16.msra.mxu0 %v2776
    %2833 = vmatpush.bf16.msra.mxu0 %v2775
    %2834 = vmatpush.bf16.msra.mxu0 %v2774
    %2835 = vmatmul.bf16.gmra.mxu0 %v2663
    %v2836 = vpop.f32.mrf.mxu0
    %v2837 = vadd.f32 %v2808, %v2836
    %v2838 = vpop.f32.mrf.mxu0
    %v2839 = vadd.f32 %v2810, %v2838
    %2840 = vmatmul.bf16.gmra.mxu0 %v2665
    %v2841 = vpop.f32.mrf.mxu0
    %v2842 = vadd.f32 %v2813, %v2841
    %v2843 = vpop.f32.mrf.mxu0
    %v2844 = vadd.f32 %v2815, %v2843
    %2845 = vmatmul.bf16.gmra.mxu0 %v2667
    %v2846 = vpop.f32.mrf.mxu0
    %v2847 = vadd.f32 %v2818, %v2846
    %v2848 = vpop.f32.mrf.mxu0
    %v2849 = vadd.f32 %v2820, %v2848
    %2850 = vmatmul.bf16.gmra.mxu0 %v2669
    %v2851 = vpop.f32.mrf.mxu0
    %v2852 = vadd.f32 %v2823, %v2851
    %v2853 = vpop.f32.mrf.mxu0
    %v2854 = vadd.f32 %v2825, %v2853
    %2855 = vdwg.mxu0
    %2856 = vst [vmem:[#allocation2] sm:$0xff] 0.0
    %v2857 = vld [vmem:[#allocation2] sm:$0xff]
    %v2858 = vadd.f32 %v2857, %v2837
    %vm2859 = vcmask 130048
    %2860 = vst.msk [vmem:[#allocation2] sm:$0xff] %vm2859, %v2858
    %v2861 = vld [vmem:[#allocation2] sm:$0xff]
    %2863 = vrot.lane.b32.xlu0 %v2839, 4
    %v2864 = vpop.permute.xlu0 %2863
    %v2866 = vadd.f32 %v2861, %v2864
    %vm2867 = vcmask 162848
    %2868 = vst.msk [vmem:[#allocation2] sm:$0xff] %vm2867, %v2866
    %v2869 = vld [vmem:[#allocation2] sm:$0xff]
    %2871 = vrot.lane.b32.xlu0 %v2842, 8
    %v2872 = vpop.permute.xlu0 %2871
    %v2874 = vadd.f32 %v2869, %v2872
    %vm2875 = vcmask 195648
    %2876 = vst.msk [vmem:[#allocation2] sm:$0xff] %vm2875, %v2874
    %v2877 = vld [vmem:[#allocation2] sm:$0xff]
    %2879 = vrot.lane.b32.xlu0 %v2844, 12
    %v2880 = vpop.permute.xlu0 %2879
    %v2882 = vadd.f32 %v2877, %v2880
    %vm2883 = vcmask 228448
    %2884 = vst.msk [vmem:[#allocation2] sm:$0xff] %vm2883, %v2882
    %v2885 = vld [vmem:[#allocation2] sm:$0xff]
    %2887 = vrot.lane.b32.xlu0 %v2847, 16
    %v2888 = vpop.permute.xlu0 %2887
    %v2890 = vadd.f32 %v2885, %v2888
    %vm2891 = vcmask 261248
    %2892 = vst.msk [vmem:[#allocation2] sm:$0xff] %vm2891, %v2890
    %v2893 = vld [vmem:[#allocation2] sm:$0xff]
    %2895 = vrot.lane.b32.xlu0 %v2849, 20
    %v2896 = vpop.permute.xlu0 %2895
    %v2898 = vadd.f32 %v2893, %v2896
    %vm2899 = vcmask 294048
    %2900 = vst.msk [vmem:[#allocation2] sm:$0xff] %vm2899, %v2898
    %v2901 = vld [vmem:[#allocation2] sm:$0xff]
    %2903 = vrot.lane.b32.xlu0 %v2852, 24
    %v2904 = vpop.permute.xlu0 %2903
    %v2906 = vadd.f32 %v2901, %v2904
    %vm2907 = vcmask 326848
    %2908 = vst.msk [vmem:[#allocation2] sm:$0xff] %vm2907, %v2906
    %v2909 = vld [vmem:[#allocation2] sm:$0xff]
    %2911 = vrot.lane.b32.xlu0 %v2854, 28
    %v2912 = vpop.permute.xlu0 %2911
    %v2914 = vadd.f32 %v2909, %v2912
    %vm2915 = vcmask 359648
    %2916 = vst.msk [vmem:[#allocation2] sm:$0xff] %vm2915, %v2914
    %v2917 = vld [vmem:[#allocation2] sm:$0xff]
    %v2918 = vld [vmem:[%s4] sm:$0x1]
    %v2920 = vperm.slane %v2918, 0
    %v2922 = vmul.f32 %v2917, %v2920
    %2923 = vst [vmem:[#allocation3] sm:$0xff] %v2922
    // Predicated region
    $region22: #{tpu_custom_call.1} parent=1 // pred_check
      _
    $region23: #{tpu_custom_call.1} parent=1 // pred_check_branch
      %2925 = sbr.rel (0) target = $region25
    $region24: #{tpu_custom_call.1} parent=1 // pred_region
      %2927 = vsyncadd [#allocation4], 0
      %s2929 = sshll.u32 [#allocation3], 4
      %s2930 = int_to_ptr.vmem [resolvable:$true] %s2929
      %s2931 = sshll.u32 %s5, 4
      %s2932 = int_to_ptr.hbm [resolvable:$true] %s2931
      %2934 = dma.vmem_to_hbm [thread:$0]  %s2930, 128, %s2932, [#allocation4]
    $region25: #{tpu_custom_call.1} parent=1 // pred_fallthru
      _
    // Predicated region
    $region26: #{tpu_custom_call.1} parent=1 // pred_check
      _
    $region27: #{tpu_custom_call.1} parent=1 // pred_check_branch
      %2936 = sbr.rel (0) target = $region29
    $region28: #{tpu_custom_call.1} parent=1 // pred_region
      %2938 = dma.done [#allocation4], 128
    $region29: #{tpu_custom_call.1} parent=1 // pred_fallthru
      _
    %2939 = vsyncpa [#allocation4], 1

</llo_original>
